<compile_context>
chip_gen: v5e
topology: v5e:2x2
jax: 0.10.0
libtpu: 0.0.40
codegen_flags: <defaults>
</compile_context>

<pallas_src>
import functools

import jax
import jax.numpy as jnp
import numpy as np
from jax.experimental import pallas as pl
from jax.experimental.pallas import tpu as pltpu

CP = 128  # lane-padded channel width (TPU lane / MXU granule)


# --------------------------- fused kernel body --------------------------------
def _conv3x3_bn_relu(pad_ref, w_ref, s_ref, b_ref, *, H2, W2):
    """3x3 conv (padding=1) + folded BN + ReLU via 9 tap-accumulated matmuls.

    pad_ref : VMEM (H2+2, W2+2, CP) f32; image in [1:H2+1, 1:W2+1], zero halo
    w_ref   : (9, CP, CP) bf16 weights, tap index k = dy*3 + dx
    s_ref/b_ref : (1, CP) f32 folded BN scale / bias
    returns : (H2*W2, CP) f32
    """
    acc = jnp.zeros((H2 * W2, CP), jnp.float32)
    for dy in range(3):
        for dx in range(3):
            tap = pad_ref[dy:dy + H2, dx:dx + W2, :].reshape(H2 * W2, CP)
            acc = acc + jnp.dot(tap.astype(jnp.bfloat16),
                                w_ref[dy * 3 + dx],
                                preferred_element_type=jnp.float32)
    # folded BN + ReLU applied once to the full f32 accumulator
    return jnp.maximum(acc * s_ref[...] + b_ref[...], 0.0)


def _down_fused_kernel(x_ref, w1_ref, s1_ref, b1_ref, w2_ref, s2_ref, b2_ref,
                       o_ref, pad_ref, *, H2, W2):
    # ---- zero ONLY the 1-pixel halo ring (interior is overwritten below) -----
    zrow = jnp.zeros((1, W2 + 2, CP), jnp.float32)
    pad_ref[0:1, :, :] = zrow
    pad_ref[H2 + 1:H2 + 2, :, :] = zrow
    zcol = jnp.zeros((H2 + 2, 1, CP), jnp.float32)
    pad_ref[:, 0:1, :] = zcol
    pad_ref[:, W2 + 1:W2 + 2, :] = zcol

    # ---- MaxPool2d(2): 4-way max over 128-aligned lane groups of the
    #      space-to-depth input (single DMA'd block, f32 VPU max) --------------
    pooled = x_ref[:, :, 0:CP]
    for k in range(1, 4):
        pooled = jnp.maximum(pooled, x_ref[:, :, k * CP:(k + 1) * CP])
    # full-lane interior store (real channels in low lanes, zeros above)
    pad_ref[1:H2 + 1, 1:W2 + 1, :] = pooled

    # ---- conv1 -> BN -> ReLU -------------------------------------------------
    y1 = _conv3x3_bn_relu(pad_ref, w1_ref, s1_ref, b1_ref, H2=H2, W2=W2)
    # write conv1's output back into the padded scratch interior for conv2
    pad_ref[1:H2 + 1, 1:W2 + 1, :] = y1.reshape(H2, W2, CP)

    # ---- conv2 -> BN -> ReLU -------------------------------------------------
    y2 = _conv3x3_bn_relu(pad_ref, w2_ref, s2_ref, b2_ref, H2=H2, W2=W2)
    o_ref[...] = y2.astype(o_ref.dtype)                      # (H2*W2, CP)


# ----------------------------- parameter prep ---------------------------------
def _fold_bn(conv_b, gamma, beta, mean, var, eps=1e-5):
    s = gamma / jnp.sqrt(var + eps)
    return s, (conv_b - mean) * s + beta


def _prep_conv(w_hwio, conv_b, gamma, beta, mean, var):
    """Fold inference-mode BN; lane-pad weights to per-tap (9, CP, CP) layout."""
    cin, cout = w_hwio.shape[2], w_hwio.shape[3]
    assert cin <= CP and cout <= CP
    s, b = _fold_bn(conv_b, gamma, beta, mean, var)
    w_p = jnp.zeros((3, 3, CP, CP), jnp.float32).at[:, :, :cin, :cout].set(w_hwio)
    w_p = w_p.reshape(9, CP, CP).astype(jnp.bfloat16)        # tap k = dy*3 + dx
    s_p = jnp.zeros((1, CP), jnp.float32).at[0, :cout].set(s)
    b_p = jnp.zeros((1, CP), jnp.float32).at[0, :cout].set(b)
    return w_p, s_p, b_p


# ------------------------------- module ---------------------------------------
def down_forward(x_nchw, params):
    N, Cin, H, W = x_nchw.shape
    assert H % 2 == 0 and W % 2 == 0
    H2, W2 = H // 2, W // 2
    Cout = params["w1"].shape[-1]

    # NCHW -> NHWC -> space-to-depth (N, H2, W2, 2, 2, Cin), channel-padded to
    # CP per pooling phase so every in-kernel load/store is lane-dense.
    x = jnp.transpose(x_nchw, (0, 2, 3, 1))
    x = x.reshape(N, H2, 2, W2, 2, Cin)
    x = jnp.transpose(x, (0, 1, 3, 2, 4, 5))                 # (N,H2,W2,2,2,Cin)
    x_s2d = jnp.zeros((N, H2, W2, 2, 2, CP), x.dtype).at[..., :Cin].set(x)
    x_s2d = x_s2d.reshape(N, H2, W2, 4 * CP)

    w1p, s1p, b1p = _prep_conv(params["w1"], params["b1"], params["g1"],
                               params["beta1"], params["m1"], params["v1"])
    w2p, s2p, b2p = _prep_conv(params["w2"], params["b2"], params["g2"],
                               params["beta2"], params["m2"], params["v2"])

    kern = functools.partial(_down_fused_kernel, H2=H2, W2=W2)

    w_spec = pl.BlockSpec((9, CP, CP), lambda n: (0, 0, 0))
    v_spec = pl.BlockSpec((1, CP), lambda n: (0, 0))

    out = pl.pallas_call(
        kern,
        out_shape=jax.ShapeDtypeStruct((N, H2 * W2, CP), jnp.float32),
        grid=(N,),
        in_specs=[pl.BlockSpec((None, H2, W2, 4 * CP), lambda n: (n, 0, 0, 0)),
                  w_spec, v_spec, v_spec,
                  w_spec, v_spec, v_spec],
        out_specs=pl.BlockSpec((None, H2 * W2, CP), lambda n: (n, 0, 0)),
        scratch_shapes=[pltpu.VMEM((H2 + 2, W2 + 2, CP), jnp.float32)],
        compiler_params=pltpu.CompilerParams(
            dimension_semantics=("parallel",),
            vmem_limit_bytes=32 * 1024 * 1024),
    )(x_s2d, w1p, s1p, b1p, w2p, s2p, b2p)

    out = out[:, :, :Cout].reshape(N, H2, W2, Cout)          # drop lane padding
    return jnp.transpose(out, (0, 3, 1, 2))                  # NHWC -> NCHW


# --------------------------- pure-JAX reference --------------------------------
def ref_forward(x_nchw, p):
    x = jnp.transpose(x_nchw, (0, 2, 3, 1))
    x = jax.lax.reduce_window(x, -jnp.inf, jax.lax.max,
                              (1, 2, 2, 1), (1, 2, 2, 1), "VALID")

    def cbr(x, w, cb, g, be, m, v):
        y = jax.lax.conv_general_dilated(
            x, w, (1, 1), "SAME",
            dimension_numbers=("NHWC", "HWIO", "NHWC"),
            precision=jax.lax.Precision.HIGHEST) + cb
        s = g / jnp.sqrt(v + 1e-5)
        return jnp.maximum((y - m) * s + be, 0.0)

    x = cbr(x, p["w1"], p["b1"], p["g1"], p["beta1"], p["m1"], p["v1"])
    x = cbr(x, p["w2"], p["b2"], p["g2"], p["beta2"], p["m2"], p["v2"])
    return jnp.transpose(x, (0, 3, 1, 2))


if __name__ == "__main__":
    key = jax.random.PRNGKey(0)
    N, Cin, H, W = 2, 4, 16, 16
    Cout = 8
    ks = jax.random.split(key, 13)

    x = jax.random.normal(ks[0], (N, Cin, H, W), jnp.float32)

    params = {
        # conv1 (HWIO) + BN1
        "w1": 0.1 * jax.random.normal(ks[1], (3, 3, Cin, Cout), jnp.float32),
        "b1": 0.1 * jax.random.normal(ks[2], (Cout,), jnp.float32),
        "g1": 1.0 + 0.1 * jax.random.normal(ks[3], (Cout,), jnp.float32),
        "beta1": 0.1 * jax.random.normal(ks[4], (Cout,), jnp.float32),
        "m1": 0.1 * jax.random.normal(ks[5], (Cout,), jnp.float32),
        "v1": jnp.abs(jax.random.normal(ks[6], (Cout,), jnp.float32)) + 0.5,
        # conv2 (HWIO) + BN2
        "w2": 0.1 * jax.random.normal(ks[7], (3, 3, Cout, Cout), jnp.float32),
        "b2": 0.1 * jax.random.normal(ks[8], (Cout,), jnp.float32),
        "g2": 1.0 + 0.1 * jax.random.normal(ks[9], (Cout,), jnp.float32),
        "beta2": 0.1 * jax.random.normal(ks[10], (Cout,), jnp.float32),
        "m2": 0.1 * jax.random.normal(ks[11], (Cout,), jnp.float32),
        "v2": jnp.abs(jax.random.normal(ks[12], (Cout,), jnp.float32)) + 0.5,
    }

    out = jax.block_until_ready(down_forward(x, params))
    assert out.shape == (N, Cout, H // 2, W // 2), out.shape

    ref = jax.block_until_ready(ref_forward(x, params))
    # Tolerance: kernel uses bf16 MXU operands with f32 accumulation; the
    # reference is full-f32 HIGHEST-precision XLA.
    np.testing.assert_allclose(np.asarray(out), np.asarray(ref),
                               rtol=5e-2, atol=5e-2)

    print("KERNEL_OK")
</pallas_src>

<mosaic_0001>
module attributes {stable_mosaic.version = 11 : i64} {
  func.func @_down_fused_kernel(%arg0: i32, %arg1: memref<1x8x8x512xf32, #tpu.memory_space<vmem>>, %arg2: memref<9x128x128xbf16, #tpu.memory_space<vmem>>, %arg3: memref<1x128xf32, #tpu.memory_space<vmem>>, %arg4: memref<1x128xf32, #tpu.memory_space<vmem>>, %arg5: memref<9x128x128xbf16, #tpu.memory_space<vmem>>, %arg6: memref<1x128xf32, #tpu.memory_space<vmem>>, %arg7: memref<1x128xf32, #tpu.memory_space<vmem>>, %arg8: memref<1x64x128xf32, #tpu.memory_space<vmem>>, %arg9: memref<10x10x128xf32, #tpu.memory_space<vmem>>) attributes {dimension_semantics = [#tpu.dimension_semantics<parallel>], iteration_bounds = array<i64: 2>, scalar_prefetch = 0 : i64, scratch_operands = 1 : i64, tpu.core_type = #tpu.core_type<tc>, window_params = [{transform_indices = @transform_0, window_bounds = array<i64: 1, 8, 8, 512>}, {pipeline_mode = #tpu.pipeline_mode<synchronous>, transform_indices = @transform_1, window_bounds = array<i64: 9, 128, 128>}, {pipeline_mode = #tpu.pipeline_mode<synchronous>, transform_indices = @transform_2, window_bounds = array<i64: 1, 128>}, {pipeline_mode = #tpu.pipeline_mode<synchronous>, transform_indices = @transform_3, window_bounds = array<i64: 1, 128>}, {pipeline_mode = #tpu.pipeline_mode<synchronous>, transform_indices = @transform_4, window_bounds = array<i64: 9, 128, 128>}, {pipeline_mode = #tpu.pipeline_mode<synchronous>, transform_indices = @transform_5, window_bounds = array<i64: 1, 128>}, {pipeline_mode = #tpu.pipeline_mode<synchronous>, transform_indices = @transform_6, window_bounds = array<i64: 1, 128>}, {transform_indices = @transform_7, window_bounds = array<i64: 1, 64, 128>}]} {
    %cst = arith.constant 0.000000e+00 : f32
    %0 = vector.broadcast %cst : f32 to vector<1x10x128xf32>
    %c0 = arith.constant 0 : index
    %c0_0 = arith.constant 0 : index
    %c0_1 = arith.constant 0 : index
    %1 = vector.load %arg9[%c0, %c0_0, %c0_1] : memref<10x10x128xf32, #tpu.memory_space<vmem>>, vector<1x10x128xf32>
    tpu.vector_store %arg9[%c0, %c0_0, %c0_1], %0 {strides = array<i32>} : memref<10x10x128xf32, #tpu.memory_space<vmem>>, vector<1x10x128xf32>,
    %c9 = arith.constant 9 : index
    %c0_2 = arith.constant 0 : index
    %c0_3 = arith.constant 0 : index
    %2 = vector.load %arg9[%c9, %c0_2, %c0_3] : memref<10x10x128xf32, #tpu.memory_space<vmem>>, vector<1x10x128xf32>
    tpu.vector_store %arg9[%c9, %c0_2, %c0_3], %0 {strides = array<i32>} : memref<10x10x128xf32, #tpu.memory_space<vmem>>, vector<1x10x128xf32>,
    %cst_4 = arith.constant 0.000000e+00 : f32
    %3 = vector.broadcast %cst_4 : f32 to vector<10x1x128xf32>
    %c0_5 = arith.constant 0 : index
    %c0_6 = arith.constant 0 : index
    %c0_7 = arith.constant 0 : index
    %4 = vector.load %arg9[%c0_5, %c0_6, %c0_7] : memref<10x10x128xf32, #tpu.memory_space<vmem>>, vector<10x1x128xf32>
    tpu.vector_store %arg9[%c0_5, %c0_6, %c0_7], %3 {strides = array<i32>} : memref<10x10x128xf32, #tpu.memory_space<vmem>>, vector<10x1x128xf32>,
    %c0_8 = arith.constant 0 : index
    %c9_9 = arith.constant 9 : index
    %c0_10 = arith.constant 0 : index
    %5 = vector.load %arg9[%c0_8, %c9_9, %c0_10] : memref<10x10x128xf32, #tpu.memory_space<vmem>>, vector<10x1x128xf32>
    tpu.vector_store %arg9[%c0_8, %c9_9, %c0_10], %3 {strides = array<i32>} : memref<10x10x128xf32, #tpu.memory_space<vmem>>, vector<10x1x128xf32>,
    %c0_11 = arith.constant 0 : index
    %c0_12 = arith.constant 0 : index
    %c0_13 = arith.constant 0 : index
    %c0_14 = arith.constant 0 : index
    %6 = vector.load %arg1[%c0_11, %c0_12, %c0_13, %c0_14] : memref<1x8x8x512xf32, #tpu.memory_space<vmem>>, vector<1x8x8x128xf32>
    %7 = vector.shape_cast %6 : vector<1x8x8x128xf32> to vector<8x8x128xf32>
    %c0_15 = arith.constant 0 : index
    %c0_16 = arith.constant 0 : index
    %c0_17 = arith.constant 0 : index
    %c128 = arith.constant 128 : index
    %8 = vector.load %arg1[%c0_15, %c0_16, %c0_17, %c128] : memref<1x8x8x512xf32, #tpu.memory_space<vmem>>, vector<1x8x8x128xf32>
    %9 = vector.shape_cast %8 : vector<1x8x8x128xf32> to vector<8x8x128xf32>
    %10 = arith.maximumf %7, %9 : vector<8x8x128xf32>
    %c0_18 = arith.constant 0 : index
    %c0_19 = arith.constant 0 : index
    %c0_20 = arith.constant 0 : index
    %c256 = arith.constant 256 : index
    %11 = vector.load %arg1[%c0_18, %c0_19, %c0_20, %c256] : memref<1x8x8x512xf32, #tpu.memory_space<vmem>>, vector<1x8x8x128xf32>
    %12 = vector.shape_cast %11 : vector<1x8x8x128xf32> to vector<8x8x128xf32>
    %13 = arith.maximumf %10, %12 : vector<8x8x128xf32>
    %c0_21 = arith.constant 0 : index
    %c0_22 = arith.constant 0 : index
    %c0_23 = arith.constant 0 : index
    %c384 = arith.constant 384 : index
    %14 = vector.load %arg1[%c0_21, %c0_22, %c0_23, %c384] : memref<1x8x8x512xf32, #tpu.memory_space<vmem>>, vector<1x8x8x128xf32>
    %15 = vector.shape_cast %14 : vector<1x8x8x128xf32> to vector<8x8x128xf32>
    %16 = arith.maximumf %13, %15 : vector<8x8x128xf32>
    %c1 = arith.constant 1 : index
    %c1_24 = arith.constant 1 : index
    %c0_25 = arith.constant 0 : index
    %17 = vector.load %arg9[%c1, %c1_24, %c0_25] : memref<10x10x128xf32, #tpu.memory_space<vmem>>, vector<8x8x128xf32>
    tpu.vector_store %arg9[%c1, %c1_24, %c0_25], %16 {strides = array<i32>} : memref<10x10x128xf32, #tpu.memory_space<vmem>>, vector<8x8x128xf32>,
    %cst_26 = arith.constant 0.000000e+00 : f32
    %18 = vector.broadcast %cst_26 : f32 to vector<64x128xf32>
    %c0_27 = arith.constant 0 : index
    %c0_28 = arith.constant 0 : index
    %c0_29 = arith.constant 0 : index
    %19 = vector.load %arg9[%c0_27, %c0_28, %c0_29] : memref<10x10x128xf32, #tpu.memory_space<vmem>>, vector<8x8x128xf32>
    %20 = vector.shape_cast %19 : vector<8x8x128xf32> to vector<64x128xf32>
    %21 = arith.truncf %20 : vector<64x128xf32> to vector<64x128xbf16>
    %c0_30 = arith.constant 0 : index
    %c0_31 = arith.constant 0 : index
    %c0_32 = arith.constant 0 : index
    %22 = vector.load %arg2[%c0_30, %c0_31, %c0_32] : memref<9x128x128xbf16, #tpu.memory_space<vmem>>, vector<1x128x128xbf16>
    %23 = vector.shape_cast %22 : vector<1x128x128xbf16> to vector<128x128xbf16>
    %cst_33 = arith.constant dense<0.000000e+00> : vector<64x128xf32>
    %24 = tpu.matmul %21, %23, %cst_33 {dimension_numbers = #tpu.dot_dimension_numbers<[1], [0], [0], [1], [0, 0, 1, 1], [], []>} : vector<64x128xbf16>, vector<128x128xbf16>, vector<64x128xf32> -> vector<64x128xf32>
    %25 = arith.addf %18, %24 : vector<64x128xf32>
    %c0_34 = arith.constant 0 : index
    %c1_35 = arith.constant 1 : index
    %c0_36 = arith.constant 0 : index
    %26 = vector.load %arg9[%c0_34, %c1_35, %c0_36] : memref<10x10x128xf32, #tpu.memory_space<vmem>>, vector<8x8x128xf32>
    %27 = vector.shape_cast %26 : vector<8x8x128xf32> to vector<64x128xf32>
    %28 = arith.truncf %27 : vector<64x128xf32> to vector<64x128xbf16>
    %c1_37 = arith.constant 1 : index
    %c0_38 = arith.constant 0 : index
    %c0_39 = arith.constant 0 : index
    %29 = vector.load %arg2[%c1_37, %c0_38, %c0_39] : memref<9x128x128xbf16, #tpu.memory_space<vmem>>, vector<1x128x128xbf16>
    %30 = vector.shape_cast %29 : vector<1x128x128xbf16> to vector<128x128xbf16>
    %cst_40 = arith.constant dense<0.000000e+00> : vector<64x128xf32>
    %31 = tpu.matmul %28, %30, %cst_40 {dimension_numbers = #tpu.dot_dimension_numbers<[1], [0], [0], [1], [0, 0, 1, 1], [], []>} : vector<64x128xbf16>, vector<128x128xbf16>, vector<64x128xf32> -> vector<64x128xf32>
    %32 = arith.addf %25, %31 : vector<64x128xf32>
    %c0_41 = arith.constant 0 : index
    %c2 = arith.constant 2 : index
    %c0_42 = arith.constant 0 : index
    %33 = vector.load %arg9[%c0_41, %c2, %c0_42] : memref<10x10x128xf32, #tpu.memory_space<vmem>>, vector<8x8x128xf32>
    %34 = vector.shape_cast %33 : vector<8x8x128xf32> to vector<64x128xf32>
    %35 = arith.truncf %34 : vector<64x128xf32> to vector<64x128xbf16>
    %c2_43 = arith.constant 2 : index
    %c0_44 = arith.constant 0 : index
    %c0_45 = arith.constant 0 : index
    %36 = vector.load %arg2[%c2_43, %c0_44, %c0_45] : memref<9x128x128xbf16, #tpu.memory_space<vmem>>, vector<1x128x128xbf16>
    %37 = vector.shape_cast %36 : vector<1x128x128xbf16> to vector<128x128xbf16>
    %cst_46 = arith.constant dense<0.000000e+00> : vector<64x128xf32>
    %38 = tpu.matmul %35, %37, %cst_46 {dimension_numbers = #tpu.dot_dimension_numbers<[1], [0], [0], [1], [0, 0, 1, 1], [], []>} : vector<64x128xbf16>, vector<128x128xbf16>, vector<64x128xf32> -> vector<64x128xf32>
    %39 = arith.addf %32, %38 : vector<64x128xf32>
    %c1_47 = arith.constant 1 : index
    %c0_48 = arith.constant 0 : index
    %c0_49 = arith.constant 0 : index
    %40 = vector.load %arg9[%c1_47, %c0_48, %c0_49] : memref<10x10x128xf32, #tpu.memory_space<vmem>>, vector<8x8x128xf32>
    %41 = vector.shape_cast %40 : vector<8x8x128xf32> to vector<64x128xf32>
    %42 = arith.truncf %41 : vector<64x128xf32> to vector<64x128xbf16>
    %c3 = arith.constant 3 : index
    %c0_50 = arith.constant 0 : index
    %c0_51 = arith.constant 0 : index
    %43 = vector.load %arg2[%c3, %c0_50, %c0_51] : memref<9x128x128xbf16, #tpu.memory_space<vmem>>, vector<1x128x128xbf16>
    %44 = vector.shape_cast %43 : vector<1x128x128xbf16> to vector<128x128xbf16>
    %cst_52 = arith.constant dense<0.000000e+00> : vector<64x128xf32>
    %45 = tpu.matmul %42, %44, %cst_52 {dimension_numbers = #tpu.dot_dimension_numbers<[1], [0], [0], [1], [0, 0, 1, 1], [], []>} : vector<64x128xbf16>, vector<128x128xbf16>, vector<64x128xf32> -> vector<64x128xf32>
    %46 = arith.addf %39, %45 : vector<64x128xf32>
    %c1_53 = arith.constant 1 : index
    %c1_54 = arith.constant 1 : index
    %c0_55 = arith.constant 0 : index
    %47 = vector.load %arg9[%c1_53, %c1_54, %c0_55] : memref<10x10x128xf32, #tpu.memory_space<vmem>>, vector<8x8x128xf32>
    %48 = vector.shape_cast %47 : vector<8x8x128xf32> to vector<64x128xf32>
    %49 = arith.truncf %48 : vector<64x128xf32> to vector<64x128xbf16>
    %c4 = arith.constant 4 : index
    %c0_56 = arith.constant 0 : index
    %c0_57 = arith.constant 0 : index
    %50 = vector.load %arg2[%c4, %c0_56, %c0_57] : memref<9x128x128xbf16, #tpu.memory_space<vmem>>, vector<1x128x128xbf16>
    %51 = vector.shape_cast %50 : vector<1x128x128xbf16> to vector<128x128xbf16>
    %cst_58 = arith.constant dense<0.000000e+00> : vector<64x128xf32>
    %52 = tpu.matmul %49, %51, %cst_58 {dimension_numbers = #tpu.dot_dimension_numbers<[1], [0], [0], [1], [0, 0, 1, 1], [], []>} : vector<64x128xbf16>, vector<128x128xbf16>, vector<64x128xf32> -> vector<64x128xf32>
    %53 = arith.addf %46, %52 : vector<64x128xf32>
    %c1_59 = arith.constant 1 : index
    %c2_60 = arith.constant 2 : index
    %c0_61 = arith.constant 0 : index
    %54 = vector.load %arg9[%c1_59, %c2_60, %c0_61] : memref<10x10x128xf32, #tpu.memory_space<vmem>>, vector<8x8x128xf32>
    %55 = vector.shape_cast %54 : vector<8x8x128xf32> to vector<64x128xf32>
    %56 = arith.truncf %55 : vector<64x128xf32> to vector<64x128xbf16>
    %c5 = arith.constant 5 : index
    %c0_62 = arith.constant 0 : index
    %c0_63 = arith.constant 0 : index
    %57 = vector.load %arg2[%c5, %c0_62, %c0_63] : memref<9x128x128xbf16, #tpu.memory_space<vmem>>, vector<1x128x128xbf16>
    %58 = vector.shape_cast %57 : vector<1x128x128xbf16> to vector<128x128xbf16>
    %cst_64 = arith.constant dense<0.000000e+00> : vector<64x128xf32>
    %59 = tpu.matmul %56, %58, %cst_64 {dimension_numbers = #tpu.dot_dimension_numbers<[1], [0], [0], [1], [0, 0, 1, 1], [], []>} : vector<64x128xbf16>, vector<128x128xbf16>, vector<64x128xf32> -> vector<64x128xf32>
    %60 = arith.addf %53, %59 : vector<64x128xf32>
    %c2_65 = arith.constant 2 : index
    %c0_66 = arith.constant 0 : index
    %c0_67 = arith.constant 0 : index
    %61 = vector.load %arg9[%c2_65, %c0_66, %c0_67] : memref<10x10x128xf32, #tpu.memory_space<vmem>>, vector<8x8x128xf32>
    %62 = vector.shape_cast %61 : vector<8x8x128xf32> to vector<64x128xf32>
    %63 = arith.truncf %62 : vector<64x128xf32> to vector<64x128xbf16>
    %c6 = arith.constant 6 : index
    %c0_68 = arith.constant 0 : index
    %c0_69 = arith.constant 0 : index
    %64 = vector.load %arg2[%c6, %c0_68, %c0_69] : memref<9x128x128xbf16, #tpu.memory_space<vmem>>, vector<1x128x128xbf16>
    %65 = vector.shape_cast %64 : vector<1x128x128xbf16> to vector<128x128xbf16>
    %cst_70 = arith.constant dense<0.000000e+00> : vector<64x128xf32>
    %66 = tpu.matmul %63, %65, %cst_70 {dimension_numbers = #tpu.dot_dimension_numbers<[1], [0], [0], [1], [0, 0, 1, 1], [], []>} : vector<64x128xbf16>, vector<128x128xbf16>, vector<64x128xf32> -> vector<64x128xf32>
    %67 = arith.addf %60, %66 : vector<64x128xf32>
    %c2_71 = arith.constant 2 : index
    %c1_72 = arith.constant 1 : index
    %c0_73 = arith.constant 0 : index
    %68 = vector.load %arg9[%c2_71, %c1_72, %c0_73] : memref<10x10x128xf32, #tpu.memory_space<vmem>>, vector<8x8x128xf32>
    %69 = vector.shape_cast %68 : vector<8x8x128xf32> to vector<64x128xf32>
    %70 = arith.truncf %69 : vector<64x128xf32> to vector<64x128xbf16>
    %c7 = arith.constant 7 : index
    %c0_74 = arith.constant 0 : index
    %c0_75 = arith.constant 0 : index
    %71 = vector.load %arg2[%c7, %c0_74, %c0_75] : memref<9x128x128xbf16, #tpu.memory_space<vmem>>, vector<1x128x128xbf16>
    %72 = vector.shape_cast %71 : vector<1x128x128xbf16> to vector<128x128xbf16>
    %cst_76 = arith.constant dense<0.000000e+00> : vector<64x128xf32>
    %73 = tpu.matmul %70, %72, %cst_76 {dimension_numbers = #tpu.dot_dimension_numbers<[1], [0], [0], [1], [0, 0, 1, 1], [], []>} : vector<64x128xbf16>, vector<128x128xbf16>, vector<64x128xf32> -> vector<64x128xf32>
    %74 = arith.addf %67, %73 : vector<64x128xf32>
    %c2_77 = arith.constant 2 : index
    %c2_78 = arith.constant 2 : index
    %c0_79 = arith.constant 0 : index
    %75 = vector.load %arg9[%c2_77, %c2_78, %c0_79] : memref<10x10x128xf32, #tpu.memory_space<vmem>>, vector<8x8x128xf32>
    %76 = vector.shape_cast %75 : vector<8x8x128xf32> to vector<64x128xf32>
    %77 = arith.truncf %76 : vector<64x128xf32> to vector<64x128xbf16>
    %c8 = arith.constant 8 : index
    %c0_80 = arith.constant 0 : index
    %c0_81 = arith.constant 0 : index
    %78 = vector.load %arg2[%c8, %c0_80, %c0_81] : memref<9x128x128xbf16, #tpu.memory_space<vmem>>, vector<1x128x128xbf16>
    %79 = vector.shape_cast %78 : vector<1x128x128xbf16> to vector<128x128xbf16>
    %cst_82 = arith.constant dense<0.000000e+00> : vector<64x128xf32>
    %80 = tpu.matmul %77, %79, %cst_82 {dimension_numbers = #tpu.dot_dimension_numbers<[1], [0], [0], [1], [0, 0, 1, 1], [], []>} : vector<64x128xbf16>, vector<128x128xbf16>, vector<64x128xf32> -> vector<64x128xf32>
    %81 = arith.addf %74, %80 : vector<64x128xf32>
    %c0_83 = arith.constant 0 : index
    %c0_84 = arith.constant 0 : index
    %82 = vector.load %arg3[%c0_83, %c0_84] : memref<1x128xf32, #tpu.memory_space<vmem>>, vector<1x128xf32>
    %83 = vector.broadcast %82 : vector<1x128xf32> to vector<64x128xf32>
    %84 = arith.mulf %81, %83 : vector<64x128xf32>
    %c0_85 = arith.constant 0 : index
    %c0_86 = arith.constant 0 : index
    %85 = vector.load %arg4[%c0_85, %c0_86] : memref<1x128xf32, #tpu.memory_space<vmem>>, vector<1x128xf32>
    %86 = vector.broadcast %85 : vector<1x128xf32> to vector<64x128xf32>
    %87 = arith.addf %84, %86 : vector<64x128xf32>
    %cst_87 = arith.constant 0.000000e+00 : f32
    %88 = vector.broadcast %cst_87 : f32 to vector<64x128xf32>
    %89 = arith.maximumf %87, %88 : vector<64x128xf32>
    %90 = vector.shape_cast %89 : vector<64x128xf32> to vector<8x8x128xf32>
    %c1_88 = arith.constant 1 : index
    %c1_89 = arith.constant 1 : index
    %c0_90 = arith.constant 0 : index
    %91 = vector.load %arg9[%c1_88, %c1_89, %c0_90] : memref<10x10x128xf32, #tpu.memory_space<vmem>>, vector<8x8x128xf32>
    tpu.vector_store %arg9[%c1_88, %c1_89, %c0_90], %90 {strides = array<i32>} : memref<10x10x128xf32, #tpu.memory_space<vmem>>, vector<8x8x128xf32>,
    %cst_91 = arith.constant 0.000000e+00 : f32
    %92 = vector.broadcast %cst_91 : f32 to vector<64x128xf32>
    %c0_92 = arith.constant 0 : index
    %c0_93 = arith.constant 0 : index
    %c0_94 = arith.constant 0 : index
    %93 = vector.load %arg9[%c0_92, %c0_93, %c0_94] : memref<10x10x128xf32, #tpu.memory_space<vmem>>, vector<8x8x128xf32>
    %94 = vector.shape_cast %93 : vector<8x8x128xf32> to vector<64x128xf32>
    %95 = arith.truncf %94 : vector<64x128xf32> to vector<64x128xbf16>
    %c0_95 = arith.constant 0 : index
    %c0_96 = arith.constant 0 : index
    %c0_97 = arith.constant 0 : index
    %96 = vector.load %arg5[%c0_95, %c0_96, %c0_97] : memref<9x128x128xbf16, #tpu.memory_space<vmem>>, vector<1x128x128xbf16>
    %97 = vector.shape_cast %96 : vector<1x128x128xbf16> to vector<128x128xbf16>
    %cst_98 = arith.constant dense<0.000000e+00> : vector<64x128xf32>
    %98 = tpu.matmul %95, %97, %cst_98 {dimension_numbers = #tpu.dot_dimension_numbers<[1], [0], [0], [1], [0, 0, 1, 1], [], []>} : vector<64x128xbf16>, vector<128x128xbf16>, vector<64x128xf32> -> vector<64x128xf32>
    %99 = arith.addf %92, %98 : vector<64x128xf32>
    %c0_99 = arith.constant 0 : index
    %c1_100 = arith.constant 1 : index
    %c0_101 = arith.constant 0 : index
    %100 = vector.load %arg9[%c0_99, %c1_100, %c0_101] : memref<10x10x128xf32, #tpu.memory_space<vmem>>, vector<8x8x128xf32>
    %101 = vector.shape_cast %100 : vector<8x8x128xf32> to vector<64x128xf32>
    %102 = arith.truncf %101 : vector<64x128xf32> to vector<64x128xbf16>
    %c1_102 = arith.constant 1 : index
    %c0_103 = arith.constant 0 : index
    %c0_104 = arith.constant 0 : index
    %103 = vector.load %arg5[%c1_102, %c0_103, %c0_104] : memref<9x128x128xbf16, #tpu.memory_space<vmem>>, vector<1x128x128xbf16>
    %104 = vector.shape_cast %103 : vector<1x128x128xbf16> to vector<128x128xbf16>
    %cst_105 = arith.constant dense<0.000000e+00> : vector<64x128xf32>
    %105 = tpu.matmul %102, %104, %cst_105 {dimension_numbers = #tpu.dot_dimension_numbers<[1], [0], [0], [1], [0, 0, 1, 1], [], []>} : vector<64x128xbf16>, vector<128x128xbf16>, vector<64x128xf32> -> vector<64x128xf32>
    %106 = arith.addf %99, %105 : vector<64x128xf32>
    %c0_106 = arith.constant 0 : index
    %c2_107 = arith.constant 2 : index
    %c0_108 = arith.constant 0 : index
    %107 = vector.load %arg9[%c0_106, %c2_107, %c0_108] : memref<10x10x128xf32, #tpu.memory_space<vmem>>, vector<8x8x128xf32>
    %108 = vector.shape_cast %107 : vector<8x8x128xf32> to vector<64x128xf32>
    %109 = arith.truncf %108 : vector<64x128xf32> to vector<64x128xbf16>
    %c2_109 = arith.constant 2 : index
    %c0_110 = arith.constant 0 : index
    %c0_111 = arith.constant 0 : index
    %110 = vector.load %arg5[%c2_109, %c0_110, %c0_111] : memref<9x128x128xbf16, #tpu.memory_space<vmem>>, vector<1x128x128xbf16>
    %111 = vector.shape_cast %110 : vector<1x128x128xbf16> to vector<128x128xbf16>
    %cst_112 = arith.constant dense<0.000000e+00> : vector<64x128xf32>
    %112 = tpu.matmul %109, %111, %cst_112 {dimension_numbers = #tpu.dot_dimension_numbers<[1], [0], [0], [1], [0, 0, 1, 1], [], []>} : vector<64x128xbf16>, vector<128x128xbf16>, vector<64x128xf32> -> vector<64x128xf32>
    %113 = arith.addf %106, %112 : vector<64x128xf32>
    %c1_113 = arith.constant 1 : index
    %c0_114 = arith.constant 0 : index
    %c0_115 = arith.constant 0 : index
    %114 = vector.load %arg9[%c1_113, %c0_114, %c0_115] : memref<10x10x128xf32, #tpu.memory_space<vmem>>, vector<8x8x128xf32>
    %115 = vector.shape_cast %114 : vector<8x8x128xf32> to vector<64x128xf32>
    %116 = arith.truncf %115 : vector<64x128xf32> to vector<64x128xbf16>
    %c3_116 = arith.constant 3 : index
    %c0_117 = arith.constant 0 : index
    %c0_118 = arith.constant 0 : index
    %117 = vector.load %arg5[%c3_116, %c0_117, %c0_118] : memref<9x128x128xbf16, #tpu.memory_space<vmem>>, vector<1x128x128xbf16>
    %118 = vector.shape_cast %117 : vector<1x128x128xbf16> to vector<128x128xbf16>
    %cst_119 = arith.constant dense<0.000000e+00> : vector<64x128xf32>
    %119 = tpu.matmul %116, %118, %cst_119 {dimension_numbers = #tpu.dot_dimension_numbers<[1], [0], [0], [1], [0, 0, 1, 1], [], []>} : vector<64x128xbf16>, vector<128x128xbf16>, vector<64x128xf32> -> vector<64x128xf32>
    %120 = arith.addf %113, %119 : vector<64x128xf32>
    %c1_120 = arith.constant 1 : index
    %c1_121 = arith.constant 1 : index
    %c0_122 = arith.constant 0 : index
    %121 = vector.load %arg9[%c1_120, %c1_121, %c0_122] : memref<10x10x128xf32, #tpu.memory_space<vmem>>, vector<8x8x128xf32>
    %122 = vector.shape_cast %121 : vector<8x8x128xf32> to vector<64x128xf32>
    %123 = arith.truncf %122 : vector<64x128xf32> to vector<64x128xbf16>
    %c4_123 = arith.constant 4 : index
    %c0_124 = arith.constant 0 : index
    %c0_125 = arith.constant 0 : index
    %124 = vector.load %arg5[%c4_123, %c0_124, %c0_125] : memref<9x128x128xbf16, #tpu.memory_space<vmem>>, vector<1x128x128xbf16>
    %125 = vector.shape_cast %124 : vector<1x128x128xbf16> to vector<128x128xbf16>
    %cst_126 = arith.constant dense<0.000000e+00> : vector<64x128xf32>
    %126 = tpu.matmul %123, %125, %cst_126 {dimension_numbers = #tpu.dot_dimension_numbers<[1], [0], [0], [1], [0, 0, 1, 1], [], []>} : vector<64x128xbf16>, vector<128x128xbf16>, vector<64x128xf32> -> vector<64x128xf32>
    %127 = arith.addf %120, %126 : vector<64x128xf32>
    %c1_127 = arith.constant 1 : index
    %c2_128 = arith.constant 2 : index
    %c0_129 = arith.constant 0 : index
    %128 = vector.load %arg9[%c1_127, %c2_128, %c0_129] : memref<10x10x128xf32, #tpu.memory_space<vmem>>, vector<8x8x128xf32>
    %129 = vector.shape_cast %128 : vector<8x8x128xf32> to vector<64x128xf32>
    %130 = arith.truncf %129 : vector<64x128xf32> to vector<64x128xbf16>
    %c5_130 = arith.constant 5 : index
    %c0_131 = arith.constant 0 : index
    %c0_132 = arith.constant 0 : index
    %131 = vector.load %arg5[%c5_130, %c0_131, %c0_132] : memref<9x128x128xbf16, #tpu.memory_space<vmem>>, vector<1x128x128xbf16>
    %132 = vector.shape_cast %131 : vector<1x128x128xbf16> to vector<128x128xbf16>
    %cst_133 = arith.constant dense<0.000000e+00> : vector<64x128xf32>
    %133 = tpu.matmul %130, %132, %cst_133 {dimension_numbers = #tpu.dot_dimension_numbers<[1], [0], [0], [1], [0, 0, 1, 1], [], []>} : vector<64x128xbf16>, vector<128x128xbf16>, vector<64x128xf32> -> vector<64x128xf32>
    %134 = arith.addf %127, %133 : vector<64x128xf32>
    %c2_134 = arith.constant 2 : index
    %c0_135 = arith.constant 0 : index
    %c0_136 = arith.constant 0 : index
    %135 = vector.load %arg9[%c2_134, %c0_135, %c0_136] : memref<10x10x128xf32, #tpu.memory_space<vmem>>, vector<8x8x128xf32>
    %136 = vector.shape_cast %135 : vector<8x8x128xf32> to vector<64x128xf32>
    %137 = arith.truncf %136 : vector<64x128xf32> to vector<64x128xbf16>
    %c6_137 = arith.constant 6 : index
    %c0_138 = arith.constant 0 : index
    %c0_139 = arith.constant 0 : index
    %138 = vector.load %arg5[%c6_137, %c0_138, %c0_139] : memref<9x128x128xbf16, #tpu.memory_space<vmem>>, vector<1x128x128xbf16>
    %139 = vector.shape_cast %138 : vector<1x128x128xbf16> to vector<128x128xbf16>
    %cst_140 = arith.constant dense<0.000000e+00> : vector<64x128xf32>
    %140 = tpu.matmul %137, %139, %cst_140 {dimension_numbers = #tpu.dot_dimension_numbers<[1], [0], [0], [1], [0, 0, 1, 1], [], []>} : vector<64x128xbf16>, vector<128x128xbf16>, vector<64x128xf32> -> vector<64x128xf32>
    %141 = arith.addf %134, %140 : vector<64x128xf32>
    %c2_141 = arith.constant 2 : index
    %c1_142 = arith.constant 1 : index
    %c0_143 = arith.constant 0 : index
    %142 = vector.load %arg9[%c2_141, %c1_142, %c0_143] : memref<10x10x128xf32, #tpu.memory_space<vmem>>, vector<8x8x128xf32>
    %143 = vector.shape_cast %142 : vector<8x8x128xf32> to vector<64x128xf32>
    %144 = arith.truncf %143 : vector<64x128xf32> to vector<64x128xbf16>
    %c7_144 = arith.constant 7 : index
    %c0_145 = arith.constant 0 : index
    %c0_146 = arith.constant 0 : index
    %145 = vector.load %arg5[%c7_144, %c0_145, %c0_146] : memref<9x128x128xbf16, #tpu.memory_space<vmem>>, vector<1x128x128xbf16>
    %146 = vector.shape_cast %145 : vector<1x128x128xbf16> to vector<128x128xbf16>
    %cst_147 = arith.constant dense<0.000000e+00> : vector<64x128xf32>
    %147 = tpu.matmul %144, %146, %cst_147 {dimension_numbers = #tpu.dot_dimension_numbers<[1], [0], [0], [1], [0, 0, 1, 1], [], []>} : vector<64x128xbf16>, vector<128x128xbf16>, vector<64x128xf32> -> vector<64x128xf32>
    %148 = arith.addf %141, %147 : vector<64x128xf32>
    %c2_148 = arith.constant 2 : index
    %c2_149 = arith.constant 2 : index
    %c0_150 = arith.constant 0 : index
    %149 = vector.load %arg9[%c2_148, %c2_149, %c0_150] : memref<10x10x128xf32, #tpu.memory_space<vmem>>, vector<8x8x128xf32>
    %150 = vector.shape_cast %149 : vector<8x8x128xf32> to vector<64x128xf32>
    %151 = arith.truncf %150 : vector<64x128xf32> to vector<64x128xbf16>
    %c8_151 = arith.constant 8 : index
    %c0_152 = arith.constant 0 : index
    %c0_153 = arith.constant 0 : index
    %152 = vector.load %arg5[%c8_151, %c0_152, %c0_153] : memref<9x128x128xbf16, #tpu.memory_space<vmem>>, vector<1x128x128xbf16>
    %153 = vector.shape_cast %152 : vector<1x128x128xbf16> to vector<128x128xbf16>
    %cst_154 = arith.constant dense<0.000000e+00> : vector<64x128xf32>
    %154 = tpu.matmul %151, %153, %cst_154 {dimension_numbers = #tpu.dot_dimension_numbers<[1], [0], [0], [1], [0, 0, 1, 1], [], []>} : vector<64x128xbf16>, vector<128x128xbf16>, vector<64x128xf32> -> vector<64x128xf32>
    %155 = arith.addf %148, %154 : vector<64x128xf32>
    %c0_155 = arith.constant 0 : index
    %c0_156 = arith.constant 0 : index
    %156 = vector.load %arg6[%c0_155, %c0_156] : memref<1x128xf32, #tpu.memory_space<vmem>>, vector<1x128xf32>
    %157 = vector.broadcast %156 : vector<1x128xf32> to vector<64x128xf32>
    %158 = arith.mulf %155, %157 : vector<64x128xf32>
    %c0_157 = arith.constant 0 : index
    %c0_158 = arith.constant 0 : index
    %159 = vector.load %arg7[%c0_157, %c0_158] : memref<1x128xf32, #tpu.memory_space<vmem>>, vector<1x128xf32>
    %160 = vector.broadcast %159 : vector<1x128xf32> to vector<64x128xf32>
    %161 = arith.addf %158, %160 : vector<64x128xf32>
    %cst_159 = arith.constant 0.000000e+00 : f32
    %162 = vector.broadcast %cst_159 : f32 to vector<64x128xf32>
    %163 = arith.maximumf %161, %162 : vector<64x128xf32>
    %c0_160 = arith.constant 0 : index
    %c0_161 = arith.constant 0 : index
    %c0_162 = arith.constant 0 : index
    %164 = vector.load %arg8[%c0_160, %c0_161, %c0_162] : memref<1x64x128xf32, #tpu.memory_space<vmem>>, vector<1x64x128xf32>
    %165 = vector.shape_cast %164 : vector<1x64x128xf32> to vector<64x128xf32>
    %166 = vector.shape_cast %163 : vector<64x128xf32> to vector<1x64x128xf32>
    tpu.vector_store %arg8[%c0_160, %c0_161, %c0_162], %166 {strides = array<i32>} : memref<1x64x128xf32, #tpu.memory_space<vmem>>, vector<1x64x128xf32>,
    return
  }
  func.func @transform_0(%arg0: i32) -> (i32, i32, i32, i32) {
    %c0_i32 = arith.constant 0 : i32
    %c0_i32_0 = arith.constant 0 : i32
    %c0_i32_1 = arith.constant 0 : i32
    %c0_i32_2 = arith.constant 0 : i32
    return %arg0, %c0_i32, %c0_i32_0, %c0_i32_1 : i32, i32, i32, i32
  }
  func.func @transform_1(%arg0: i32) -> (i32, i32, i32) {
    %c0_i32 = arith.constant 0 : i32
    %c0_i32_0 = arith.constant 0 : i32
    %c0_i32_1 = arith.constant 0 : i32
    %c0_i32_2 = arith.constant 0 : i32
    return %c0_i32, %c0_i32_0, %c0_i32_1 : i32, i32, i32
  }
  func.func @transform_2(%arg0: i32) -> (i32, i32) {
    %c0_i32 = arith.constant 0 : i32
    %c0_i32_0 = arith.constant 0 : i32
    %c0_i32_1 = arith.constant 0 : i32
    return %c0_i32, %c0_i32_0 : i32, i32
  }
  func.func @transform_3(%arg0: i32) -> (i32, i32) {
    %c0_i32 = arith.constant 0 : i32
    %c0_i32_0 = arith.constant 0 : i32
    %c0_i32_1 = arith.constant 0 : i32
    return %c0_i32, %c0_i32_0 : i32, i32
  }
  func.func @transform_4(%arg0: i32) -> (i32, i32, i32) {
    %c0_i32 = arith.constant 0 : i32
    %c0_i32_0 = arith.constant 0 : i32
    %c0_i32_1 = arith.constant 0 : i32
    %c0_i32_2 = arith.constant 0 : i32
    return %c0_i32, %c0_i32_0, %c0_i32_1 : i32, i32, i32
  }
  func.func @transform_5(%arg0: i32) -> (i32, i32) {
    %c0_i32 = arith.constant 0 : i32
    %c0_i32_0 = arith.constant 0 : i32
    %c0_i32_1 = arith.constant 0 : i32
    return %c0_i32, %c0_i32_0 : i32, i32
  }
  func.func @transform_6(%arg0: i32) -> (i32, i32) {
    %c0_i32 = arith.constant 0 : i32
    %c0_i32_0 = arith.constant 0 : i32
    %c0_i32_1 = arith.constant 0 : i32
    return %c0_i32, %c0_i32_0 : i32, i32
  }
  func.func @transform_7(%arg0: i32) -> (i32, i32, i32) {
    %c0_i32 = arith.constant 0 : i32
    %c0_i32_0 = arith.constant 0 : i32
    %c0_i32_1 = arith.constant 0 : i32
    return %arg0, %c0_i32, %c0_i32_0 : i32, i32, i32
  }
}

</mosaic_0001>

<llo_original>
// kernel: tpu_custom_call.1
$region0: #{tpu_custom_call.1}
  #allocation0 [shape = 'u32[]', space=smem, size = 0x4, offset = 0x4, fixed_abs, tag = 'smem constant byte address 0x4 - core index']
  #allocation1 [shape = 'u32[72,128]{1,0:T(1,128)}', space=vmem, size = 0x9000, scoped, tag = 'internal scratch']
  #allocation2 [shape = 'f32[10,10,128]{2,1,0:T(8,128)}', space=vmem, size = 0x14000, scoped, tag = 'scratch operand']
  %s0 = inlined_call_operand.hbm [shape: f32[2,8,8,512], index: 0, kind: input, shape index: {}]
  %s1 = inlined_call_operand.hbm [shape: bf16[9,128,128], index: 1, kind: input, shape index: {}]
  %s2 = inlined_call_operand.vmem [shape: f32[1,128], index: 2, kind: input, shape index: {}]
  %s3 = inlined_call_operand.vmem [shape: f32[1,128], index: 3, kind: input, shape index: {}]
  %s4 = inlined_call_operand.hbm [shape: bf16[9,128,128], index: 4, kind: input, shape index: {}]
  %s5 = inlined_call_operand.vmem [shape: f32[1,128], index: 5, kind: input, shape index: {}]
  %s6 = inlined_call_operand.vmem [shape: f32[1,128], index: 6, kind: input, shape index: {}]
  %s7 = inlined_call_operand.hbm [shape: f32[2,64,128], index: 7, kind: output, shape index: {}]
  %s8 = sld [smem:[#allocation0]]
  $region73: #{tpu_custom_call.1} parent=0
    _
  %s10 = ssub.s32 1, %s8
  %s11 = scalar_select 0, %s10, %s8
  $region1: #{tpu_custom_call.1} parent=0
    #allocation3 [shape = 'u8[262144]{0}', space=vmem, size = 0x40000, scoped, tag = 'input window, operand 0']
    #allocation4 [shape = 's32[2]{0}', space=sflag, size = 0x8, scoped, tag = 'scoped memory for tpu_custom_call.1']
    #allocation5 [shape = 's32[2]{0}', space=sflag, size = 0x8, scoped, tag = 'scoped memory for tpu_custom_call.1']
    #allocation6 [shape = 'u8[294912]{0}', space=vmem, size = 0x48000, scoped, tag = 'input window, operand 1, single buffered']
    #allocation7 [shape = 's32[1]{0}', space=sflag, size = 0x4, scoped, tag = 'scoped memory for tpu_custom_call.1']
    #allocation8 [shape = 'u8[294912]{0}', space=vmem, size = 0x48000, scoped, tag = 'input window, operand 4, single buffered']
    #allocation9 [shape = 'u8[65536]{0}', space=vmem, size = 0x10000, scoped, tag = 'output window, operand 0']
    %12 = vsyncpa [#allocation4], 0
    %s13 = scalar_lea.sflag [#allocation4], 1
    %14 = vsyncpa %s13, 0
    %15 = vsyncpa [#allocation7], 0
    %16 = vsyncpa [#allocation5], 0
    %s17 = scalar_lea.sflag [#allocation5], 1
    %18 = vsyncpa %s17, 0
    loop: start=0, step=1, limit=4
    $region2: #{tpu_custom_call.1} parent=1 // loop_pre_header
      _
    $region3: #{tpu_custom_call.1} parent=1 // loop_header
      %s20 = sphi 0, %s24
      %p21 = scmp.ge.s32.totalorder %s20, 4
      %s30 = sphi 0, %s32
      %s33 = sphi 0, %s30
      %s34 = sphi 0, %s33
      %s50 = sphi 0, %s34
      %s54 = sphi 0, %s54
      %s56 = sphi 0, %s54
      %s57 = sphi 0, %s56
      %s71 = sphi 0, %s57
      %s75 = sphi 0, %s75
      %s77 = sphi 0, %s75
      %s78 = sphi 0, %s77
      %s92 = sphi 0, %s78
      %s96 = sphi 0, %s96
      %s98 = sphi 0, %s96
      %s99 = sphi 0, %s98
      %s113 = sphi 0, %s99
      %s117 = sphi 0, %s117
      %s119 = sphi 0, %s117
      %s120 = sphi 0, %s119
      %s134 = sphi 0, %s120
      %s138 = sphi 0, %s138
      %s140 = sphi 0, %s138
      %s141 = sphi 0, %s140
      %s155 = sphi 0, %s141
      %s159 = sphi 0, %s159
      %s161 = sphi 0, %s159
      %s162 = sphi 0, %s161
      %s176 = sphi 0, %s162
      %s182 = sphi 0, %s184
      %s185 = sphi 0, %s182
      %s186 = sphi 0, %s185
      %s202 = sphi 0, %s186
    $region4: #{tpu_custom_call.1} parent=1 // loop_header_branch
      %23 = sbr.rel (%p21) target = $region8
    $region5: #{tpu_custom_call.1} parent=1 // loop_body
      %s25 = ssub.s32 %s20, 1
      %s26 = ssub.s32 %s20, 2
      %s27 = sadd.s32 %s20, 1
      %s28 = ssub.s32 %s20, %s27
      %p29 = scmp.eq.s32.totalorder %s28, 0
      %s31 = sadd.s32 %s30, 1
      %s32 = scalar_select %p29, %s30, %s31
      %p35 = pneg %p29
      %p36 = scmp.eq.s32.totalorder %s20, 1
      %p37 = por %p35, %p36
      %p38 = scmp.ne.s32.totalorder %s30, %s33
      %p39 = scmp.eq.s32.totalorder %s20, 0
      %p40 = por %p38, %p39
      %p41 = scmp.ne.s32.totalorder %s30, %s33
      %p42 = scmp.eq.s32.totalorder %s25, 1
      %p43 = por %p41, %p42
      %p44 = scmp.ne.s32.totalorder %s33, %s34
      %p45 = scmp.eq.s32.totalorder %s25, 0
      %p46 = por %p44, %p45
      %p47 = scmp.ne.s32.totalorder %s33, %s34
      %p48 = scmp.eq.s32.totalorder %s26, 1
      %p49 = por %p47, %p48
      %p51 = scmp.ne.s32.totalorder %s34, %s50
      %p52 = scmp.eq.s32.totalorder %s26, 0
      %p53 = por %p51, %p52
      %s55 = sadd.s32 %s54, 1
      %p58 = scmp.eq.s32.totalorder %s20, 1
      %p59 = scmp.ne.s32.totalorder %s54, %s56
      %p60 = scmp.eq.s32.totalorder %s20, 0
      %p61 = por %p59, %p60
      %p62 = scmp.ne.s32.totalorder %s54, %s56
      %p63 = scmp.eq.s32.totalorder %s25, 1
      %p64 = por %p62, %p63
      %p65 = scmp.ne.s32.totalorder %s56, %s57
      %p66 = scmp.eq.s32.totalorder %s25, 0
      %p67 = por %p65, %p66
      %p68 = scmp.ne.s32.totalorder %s56, %s57
      %p69 = scmp.eq.s32.totalorder %s26, 1
      %p70 = por %p68, %p69
      %p72 = scmp.ne.s32.totalorder %s57, %s71
      %p73 = scmp.eq.s32.totalorder %s26, 0
      %p74 = por %p72, %p73
      %s76 = sadd.s32 %s75, 1
      %p79 = scmp.eq.s32.totalorder %s20, 1
      %p80 = scmp.ne.s32.totalorder %s75, %s77
      %p81 = scmp.eq.s32.totalorder %s20, 0
      %p82 = por %p80, %p81
      %p83 = scmp.ne.s32.totalorder %s75, %s77
      %p84 = scmp.eq.s32.totalorder %s25, 1
      %p85 = por %p83, %p84
      %p86 = scmp.ne.s32.totalorder %s77, %s78
      %p87 = scmp.eq.s32.totalorder %s25, 0
      %p88 = por %p86, %p87
      %p89 = scmp.ne.s32.totalorder %s77, %s78
      %p90 = scmp.eq.s32.totalorder %s26, 1
      %p91 = por %p89, %p90
      %p93 = scmp.ne.s32.totalorder %s78, %s92
      %p94 = scmp.eq.s32.totalorder %s26, 0
      %p95 = por %p93, %p94
      %s97 = sadd.s32 %s96, 1
      %p100 = scmp.eq.s32.totalorder %s20, 1
      %p101 = scmp.ne.s32.totalorder %s96, %s98
      %p102 = scmp.eq.s32.totalorder %s20, 0
      %p103 = por %p101, %p102
      %p104 = scmp.ne.s32.totalorder %s96, %s98
      %p105 = scmp.eq.s32.totalorder %s25, 1
      %p106 = por %p104, %p105
      %p107 = scmp.ne.s32.totalorder %s98, %s99
      %p108 = scmp.eq.s32.totalorder %s25, 0
      %p109 = por %p107, %p108
      %p110 = scmp.ne.s32.totalorder %s98, %s99
      %p111 = scmp.eq.s32.totalorder %s26, 1
      %p112 = por %p110, %p111
      %p114 = scmp.ne.s32.totalorder %s99, %s113
      %p115 = scmp.eq.s32.totalorder %s26, 0
      %p116 = por %p114, %p115
      %s118 = sadd.s32 %s117, 1
      %p121 = scmp.eq.s32.totalorder %s20, 1
      %p122 = scmp.ne.s32.totalorder %s117, %s119
      %p123 = scmp.eq.s32.totalorder %s20, 0
      %p124 = por %p122, %p123
      %p125 = scmp.ne.s32.totalorder %s117, %s119
      %p126 = scmp.eq.s32.totalorder %s25, 1
      %p127 = por %p125, %p126
      %p128 = scmp.ne.s32.totalorder %s119, %s120
      %p129 = scmp.eq.s32.totalorder %s25, 0
      %p130 = por %p128, %p129
      %p131 = scmp.ne.s32.totalorder %s119, %s120
      %p132 = scmp.eq.s32.totalorder %s26, 1
      %p133 = por %p131, %p132
      %p135 = scmp.ne.s32.totalorder %s120, %s134
      %p136 = scmp.eq.s32.totalorder %s26, 0
      %p137 = por %p135, %p136
      %s139 = sadd.s32 %s138, 1
      %p142 = scmp.eq.s32.totalorder %s20, 1
      %p143 = scmp.ne.s32.totalorder %s138, %s140
      %p144 = scmp.eq.s32.totalorder %s20, 0
      %p145 = por %p143, %p144
      %p146 = scmp.ne.s32.totalorder %s138, %s140
      %p147 = scmp.eq.s32.totalorder %s25, 1
      %p148 = por %p146, %p147
      %p149 = scmp.ne.s32.totalorder %s140, %s141
      %p150 = scmp.eq.s32.totalorder %s25, 0
      %p151 = por %p149, %p150
      %p152 = scmp.ne.s32.totalorder %s140, %s141
      %p153 = scmp.eq.s32.totalorder %s26, 1
      %p154 = por %p152, %p153
      %p156 = scmp.ne.s32.totalorder %s141, %s155
      %p157 = scmp.eq.s32.totalorder %s26, 0
      %p158 = por %p156, %p157
      %s160 = sadd.s32 %s159, 1
      %p163 = scmp.eq.s32.totalorder %s20, 1
      %p164 = scmp.ne.s32.totalorder %s159, %s161
      %p165 = scmp.eq.s32.totalorder %s20, 0
      %p166 = por %p164, %p165
      %p167 = scmp.ne.s32.totalorder %s159, %s161
      %p168 = scmp.eq.s32.totalorder %s25, 1
      %p169 = por %p167, %p168
      %p170 = scmp.ne.s32.totalorder %s161, %s162
      %p171 = scmp.eq.s32.totalorder %s25, 0
      %p172 = por %p170, %p171
      %p173 = scmp.ne.s32.totalorder %s161, %s162
      %p174 = scmp.eq.s32.totalorder %s26, 1
      %p175 = por %p173, %p174
      %p177 = scmp.ne.s32.totalorder %s162, %s176
      %p178 = scmp.eq.s32.totalorder %s26, 0
      %p179 = por %p177, %p178
      %s180 = ssub.s32 %s20, %s27
      %p181 = scmp.eq.s32.totalorder %s180, 0
      %s183 = sadd.s32 %s182, 1
      %s184 = scalar_select %p181, %s182, %s183
      %p187 = pneg %p181
      %p188 = scmp.eq.s32.totalorder %s20, 1
      %p189 = por %p187, %p188
      %p190 = scmp.ne.s32.totalorder %s182, %s185
      %p191 = scmp.eq.s32.totalorder %s20, 0
      %p192 = por %p190, %p191
      %p193 = scmp.ne.s32.totalorder %s182, %s185
      %p194 = scmp.eq.s32.totalorder %s25, 1
      %p195 = por %p193, %p194
      %p196 = scmp.ne.s32.totalorder %s185, %s186
      %p197 = scmp.eq.s32.totalorder %s25, 0
      %p198 = por %p196, %p197
      %p199 = scmp.ne.s32.totalorder %s185, %s186
      %p200 = scmp.eq.s32.totalorder %s26, 1
      %p201 = por %p199, %p200
      %p203 = scmp.ne.s32.totalorder %s186, %s202
      %p204 = scmp.eq.s32.totalorder %s26, 0
      %p205 = por %p203, %p204
      %p206 = scmp.le.s32.totalorder 1, %s20
      %p207 = scmp.lt.s32.totalorder %s20, 3
      %p208 = pnand %p206, %p207
      %p209 = pneg %p208
      // Predicated region
      $region9: #{tpu_custom_call.1} parent=5 // pred_check
        _
      $region10: #{tpu_custom_call.1} parent=5 // pred_check_branch
        %211 = sbr.rel (%p208) target = $region12
      $region11: #{tpu_custom_call.1} parent=5 // pred_region
        %s212 = ssub.s32 %s20, 1
        // Predicated region
        $region13: #{tpu_custom_call.1} parent=11 // pred_check
          %p213 = pneg %p67
        $region14: #{tpu_custom_call.1} parent=11 // pred_check_branch
          %215 = sbr.rel (%p213) target = $region16
        $region15: #{tpu_custom_call.1} parent=11 // pred_region
          %217 = vsyncadd [#allocation7], 0
          %s218 = sshll.u32 %s1, 4
          %s219 = int_to_ptr.hbm [resolvable:$true] %s218
          %s220 = sshll.u32 [#allocation6], 4
          %s221 = int_to_ptr.vmem [resolvable:$true] %s220
          %226 = dma.hbm_to_vmem [thread:$0]  %s219, 9216, %s221, [#allocation7], 64, 64, 4
        $region16: #{tpu_custom_call.1} parent=11 // pred_fallthru
          _
        // Predicated region
        $region17: #{tpu_custom_call.1} parent=11 // pred_check
          %p227 = pneg %p88
        $region18: #{tpu_custom_call.1} parent=11 // pred_check_branch
          %229 = sbr.rel (%p227) target = $region20
        $region19: #{tpu_custom_call.1} parent=11 // pred_region
          _
        $region20: #{tpu_custom_call.1} parent=11 // pred_fallthru
          _
        // Predicated region
        $region21: #{tpu_custom_call.1} parent=11 // pred_check
          %p230 = pneg %p109
        $region22: #{tpu_custom_call.1} parent=11 // pred_check_branch
          %232 = sbr.rel (%p230) target = $region24
        $region23: #{tpu_custom_call.1} parent=11 // pred_region
          _
        $region24: #{tpu_custom_call.1} parent=11 // pred_fallthru
          _
        // Predicated region
        $region25: #{tpu_custom_call.1} parent=11 // pred_check
          %p233 = pneg %p130
        $region26: #{tpu_custom_call.1} parent=11 // pred_check_branch
          %235 = sbr.rel (%p233) target = $region28
        $region27: #{tpu_custom_call.1} parent=11 // pred_region
          %237 = vsyncadd [#allocation7], 0
          %s238 = sshll.u32 %s4, 4
          %s239 = int_to_ptr.hbm [resolvable:$true] %s238
          %s240 = sshll.u32 [#allocation8], 4
          %s241 = int_to_ptr.vmem [resolvable:$true] %s240
          %246 = dma.hbm_to_vmem [thread:$0]  %s239, 9216, %s241, [#allocation7], 64, 64, 4
        $region28: #{tpu_custom_call.1} parent=11 // pred_fallthru
          _
        // Predicated region
        $region29: #{tpu_custom_call.1} parent=11 // pred_check
          %p247 = pneg %p151
        $region30: #{tpu_custom_call.1} parent=11 // pred_check_branch
          %249 = sbr.rel (%p247) target = $region32
        $region31: #{tpu_custom_call.1} parent=11 // pred_region
          _
        $region32: #{tpu_custom_call.1} parent=11 // pred_fallthru
          _
        // Predicated region
        $region33: #{tpu_custom_call.1} parent=11 // pred_check
          %p250 = pneg %p172
        $region34: #{tpu_custom_call.1} parent=11 // pred_check_branch
          %252 = sbr.rel (%p250) target = $region36
        $region35: #{tpu_custom_call.1} parent=11 // pred_region
          _
        $region36: #{tpu_custom_call.1} parent=11 // pred_fallthru
          _
      $region12: #{tpu_custom_call.1} parent=5 // pred_fallthru
        _
      %p253 = scmp.lt.s32.totalorder %s20, 2
      // Predicated region
      $region37: #{tpu_custom_call.1} parent=5 // pred_check
        %p254 = pneg %p253
      $region38: #{tpu_custom_call.1} parent=5 // pred_check_branch
        %256 = sbr.rel (%p254) target = $region40
      $region39: #{tpu_custom_call.1} parent=5 // pred_region
        // Predicated region
        $region41: #{tpu_custom_call.1} parent=39 // pred_check
          %p257 = pneg %p40
        $region42: #{tpu_custom_call.1} parent=39 // pred_check_branch
          %259 = sbr.rel (%p257) target = $region44
        $region43: #{tpu_custom_call.1} parent=39 // pred_region
          %s260 = sand.u32 %s30, 1
          %s261 = scalar_lea.sflag [#allocation4], %s260
          %s262 = sand.u32 %s30, 1
          %s263 = smul.addr %s262, 256
          %s264 = scalar_lea.vmem [#allocation3], %s263
          %266 = vsyncadd %s261, 0
          %s267 = smul.addr %s20, 32
          %s268 = smul.addr %s267, 8
          %s269 = scalar_lea.hbm %s0, %s268
          %s270 = sshll.u32 %s269, 4
          %s271 = int_to_ptr.hbm [resolvable:$true] %s270
          %s272 = sshll.u32 %s264, 4
          %s273 = int_to_ptr.vmem [resolvable:$true] %s272
          %278 = dma.hbm_to_vmem [thread:$0]  %s271, 4096, %s273, %s261, 512, 512, 32
        $region44: #{tpu_custom_call.1} parent=39 // pred_fallthru
          _
      $region40: #{tpu_custom_call.1} parent=5 // pred_fallthru
        _
      %p279 = scmp.le.s32.totalorder 1, %s20
      %p280 = scmp.lt.s32.totalorder %s20, 3
      %p281 = pnand %p279, %p280
      %p282 = pneg %p281
      // Predicated region
      $region45: #{tpu_custom_call.1} parent=5 // pred_check
        _
      $region46: #{tpu_custom_call.1} parent=5 // pred_check_branch
        %284 = sbr.rel (%p281) target = $region48
      $region47: #{tpu_custom_call.1} parent=5 // pred_region
        %s285 = ssub.s32 %s20, 1
        %s286 = sand.u32 %s33, 1
        %s287 = scalar_lea.sflag [#allocation4], %s286
        %s288 = sand.u32 %s33, 1
        %s289 = smul.addr %s288, 256
        %s290 = scalar_lea.vmem [#allocation3], %s289
        // Predicated region
        $region49: #{tpu_custom_call.1} parent=47 // pred_check
          %p291 = pneg %p46
        $region50: #{tpu_custom_call.1} parent=47 // pred_check_branch
          %293 = sbr.rel (%p291) target = $region52
        $region51: #{tpu_custom_call.1} parent=47 // pred_region
          %295 = dma.done %s287, 4096
        $region52: #{tpu_custom_call.1} parent=47 // pred_fallthru
          _
        // Predicated region
        $region53: #{tpu_custom_call.1} parent=47 // pred_check
          %p296 = pneg %p67
        $region54: #{tpu_custom_call.1} parent=47 // pred_check_branch
          %298 = sbr.rel (%p296) target = $region56
        $region55: #{tpu_custom_call.1} parent=47 // pred_region
          %300 = dma.done [#allocation7], 9216
        $region56: #{tpu_custom_call.1} parent=47 // pred_fallthru
          _
        // Predicated region
        $region57: #{tpu_custom_call.1} parent=47 // pred_check
          %p301 = pneg %p130
        $region58: #{tpu_custom_call.1} parent=47 // pred_check_branch
          %303 = sbr.rel (%p301) target = $region60
        $region59: #{tpu_custom_call.1} parent=47 // pred_region
          %305 = dma.done [#allocation7], 9216
        $region60: #{tpu_custom_call.1} parent=47 // pred_fallthru
          _
        %s306 = sand.u32 %s33, 1
        %s307 = scalar_lea.sflag [#allocation4], %s306
        %s308 = sand.u32 %s33, 1
        %s309 = smul.addr %s308, 256
        %s310 = scalar_lea.vmem [#allocation3], %s309
        %p311 = pneg %p46
        %p312 = pneg %p43
        %p313 = pneg %p67
        %p314 = pneg %p64
        %p315 = pneg %p88
        %p316 = pneg %p85
        %p317 = pneg %p109
        %p318 = pneg %p106
        %p319 = pneg %p130
        %p320 = pneg %p127
        %p321 = pneg %p151
        %p322 = pneg %p148
        %p323 = pneg %p172
        %p324 = pneg %p169
        %p325 = pneg %p198
        %p326 = pneg %p195
        %s327 = sand.u32 %s185, 1
        %s328 = scalar_lea.sflag [#allocation5], %s327
        %s329 = sand.u32 %s185, 1
        %s330 = smul.addr %s329, 64
        %s331 = scalar_lea.vmem [#allocation9], %s330
        %332 = vst [vmem:[#allocation2] sm:$0xff] 0.0
        %333 = vst [vmem:[#allocation2 + $0x8] sm:$0x3] 0.0
        %s334 = scalar_lea.vmem [#allocation2], 144
        %335 = vst [vmem:[%s334] sm:$0xff] 0.0
        %336 = vst [vmem:[%s334 + $0x8] sm:$0x3] 0.0
        %337 = vst [vmem:[#allocation2] sm:$0x1] 0.0
        %338 = vst [vmem:[#allocation2 + $0x10] sm:$0x1] 0.0
        %339 = vst [vmem:[#allocation2 + $0x20] sm:$0x1] 0.0
        %340 = vst [vmem:[#allocation2 + $0x30] sm:$0x1] 0.0
        %341 = vst [vmem:[#allocation2 + $0x40] sm:$0x1] 0.0
        %342 = vst [vmem:[#allocation2 + $0x50] sm:$0x1] 0.0
        %343 = vst [vmem:[#allocation2 + $0x60] sm:$0x1] 0.0
        %344 = vst [vmem:[#allocation2 + $0x70] sm:$0x1] 0.0
        %345 = vst [vmem:[#allocation2 + $0x80] sm:$0x1] 0.0
        %346 = vst [vmem:[#allocation2 + $0x90] sm:$0x1] 0.0
        %347 = vst [vmem:[#allocation2 + $0x9] sm:$0x1] 0.0
        %348 = vst [vmem:[#allocation2 + $0x19] sm:$0x1] 0.0
        %349 = vst [vmem:[#allocation2 + $0x29] sm:$0x1] 0.0
        %350 = vst [vmem:[#allocation2 + $0x39] sm:$0x1] 0.0
        %351 = vst [vmem:[#allocation2 + $0x49] sm:$0x1] 0.0
        %352 = vst [vmem:[#allocation2 + $0x59] sm:$0x1] 0.0
        %353 = vst [vmem:[#allocation2 + $0x69] sm:$0x1] 0.0
        %354 = vst [vmem:[#allocation2 + $0x79] sm:$0x1] 0.0
        %355 = vst [vmem:[#allocation2 + $0x89] sm:$0x1] 0.0
        %356 = vst [vmem:[#allocation2 + $0x99] sm:$0x1] 0.0
        %v357 = vld [vmem:[%s290] sm:$0xff]
        %v358 = vld [vmem:[%s290 + $0x20] sm:$0xff]
        %v359 = vld [vmem:[%s290 + $0x40] sm:$0xff]
        %v360 = vld [vmem:[%s290 + $0x60] sm:$0xff]
        %v361 = vld [vmem:[%s290 + $0x80] sm:$0xff]
        %v362 = vld [vmem:[%s290 + $0xa0] sm:$0xff]
        %v363 = vld [vmem:[%s290 + $0xc0] sm:$0xff]
        %v364 = vld [vmem:[%s290 + $0xe0] sm:$0xff]
        %v365 = vld [vmem:[%s290 + $0x8] sm:$0xff]
        %v366 = vld [vmem:[%s290 + $0x28] sm:$0xff]
        %v367 = vld [vmem:[%s290 + $0x48] sm:$0xff]
        %v368 = vld [vmem:[%s290 + $0x68] sm:$0xff]
        %v369 = vld [vmem:[%s290 + $0x88] sm:$0xff]
        %v370 = vld [vmem:[%s290 + $0xa8] sm:$0xff]
        %v371 = vld [vmem:[%s290 + $0xc8] sm:$0xff]
        %v372 = vld [vmem:[%s290 + $0xe8] sm:$0xff]
        %v373 = vmax.f32 %v357, %v365
        %v374 = vmax.f32 %v358, %v366
        %v375 = vmax.f32 %v359, %v367
        %v376 = vmax.f32 %v360, %v368
        %v377 = vmax.f32 %v361, %v369
        %v378 = vmax.f32 %v362, %v370
        %v379 = vmax.f32 %v363, %v371
        %v380 = vmax.f32 %v364, %v372
        %v381 = vld [vmem:[%s290 + $0x10] sm:$0xff]
        %v382 = vld [vmem:[%s290 + $0x30] sm:$0xff]
        %v383 = vld [vmem:[%s290 + $0x50] sm:$0xff]
        %v384 = vld [vmem:[%s290 + $0x70] sm:$0xff]
        %v385 = vld [vmem:[%s290 + $0x90] sm:$0xff]
        %v386 = vld [vmem:[%s290 + $0xb0] sm:$0xff]
        %v387 = vld [vmem:[%s290 + $0xd0] sm:$0xff]
        %v388 = vld [vmem:[%s290 + $0xf0] sm:$0xff]
        %v389 = vmax.f32 %v373, %v381
        %v390 = vmax.f32 %v374, %v382
        %v391 = vmax.f32 %v375, %v383
        %v392 = vmax.f32 %v376, %v384
        %v393 = vmax.f32 %v377, %v385
        %v394 = vmax.f32 %v378, %v386
        %v395 = vmax.f32 %v379, %v387
        %v396 = vmax.f32 %v380, %v388
        %v397 = vld [vmem:[%s290 + $0x18] sm:$0xff]
        %v398 = vld [vmem:[%s290 + $0x38] sm:$0xff]
        %v399 = vld [vmem:[%s290 + $0x58] sm:$0xff]
        %v400 = vld [vmem:[%s290 + $0x78] sm:$0xff]
        %v401 = vld [vmem:[%s290 + $0x98] sm:$0xff]
        %v402 = vld [vmem:[%s290 + $0xb8] sm:$0xff]
        %v403 = vld [vmem:[%s290 + $0xd8] sm:$0xff]
        %v404 = vld [vmem:[%s290 + $0xf8] sm:$0xff]
        %v405 = vmax.f32 %v389, %v397
        %v406 = vmax.f32 %v390, %v398
        %v407 = vmax.f32 %v391, %v399
        %v408 = vmax.f32 %v392, %v400
        %v409 = vmax.f32 %v393, %v401
        %v410 = vmax.f32 %v394, %v402
        %v411 = vmax.f32 %v395, %v403
        %v412 = vmax.f32 %v396, %v404
        %s413 = scalar_lea.vmem [#allocation2], 16
        %414 = vst [vmem:[%s413 + $0x1] sm:$0xff] %v405
        %415 = vst [vmem:[%s413 + $0x11] sm:$0xff] %v406
        %416 = vst [vmem:[%s413 + $0x21] sm:$0xff] %v407
        %417 = vst [vmem:[%s413 + $0x31] sm:$0xff] %v408
        %418 = vst [vmem:[%s413 + $0x41] sm:$0xff] %v409
        %419 = vst [vmem:[%s413 + $0x51] sm:$0xff] %v410
        %420 = vst [vmem:[%s413 + $0x61] sm:$0xff] %v411
        %421 = vst [vmem:[%s413 + $0x71] sm:$0xff] %v412
        %v422 = vld [vmem:[#allocation2] sm:$0xff]
        %v423 = vld [vmem:[#allocation2 + $0x10] sm:$0xff]
        %v424 = vld [vmem:[#allocation2 + $0x20] sm:$0xff]
        %v425 = vld [vmem:[#allocation2 + $0x30] sm:$0xff]
        %v426 = vld [vmem:[#allocation2 + $0x40] sm:$0xff]
        %v427 = vld [vmem:[#allocation2 + $0x50] sm:$0xff]
        %v428 = vld [vmem:[#allocation2 + $0x60] sm:$0xff]
        %v429 = vld [vmem:[#allocation2 + $0x70] sm:$0xff]
        %v430 = vpack.c.bf16 %v423, %v422
        %v431 = vpack.c.bf16 %v425, %v424
        %v432 = vpack.c.bf16 %v427, %v426
        %v433 = vpack.c.bf16 %v429, %v428
        %v434 = vld [vmem:[#allocation6] sm:$0xf]
        %v435 = vld [vmem:[#allocation6 + $0x4] sm:$0xf]
        %v436 = vld [vmem:[#allocation6 + $0x8] sm:$0xf]
        %v437 = vld [vmem:[#allocation6 + $0xc] sm:$0xf]
        %v438 = vld [vmem:[#allocation6 + $0x10] sm:$0xf]
        %v439 = vld [vmem:[#allocation6 + $0x14] sm:$0xf]
        %v440 = vld [vmem:[#allocation6 + $0x18] sm:$0xf]
        %v441 = vld [vmem:[#allocation6 + $0x1c] sm:$0xf]
        %v442 = vld [vmem:[#allocation6 + $0x20] sm:$0xf]
        %v443 = vld [vmem:[#allocation6 + $0x24] sm:$0xf]
        %v444 = vld [vmem:[#allocation6 + $0x28] sm:$0xf]
        %v445 = vld [vmem:[#allocation6 + $0x2c] sm:$0xf]
        %v446 = vld [vmem:[#allocation6 + $0x30] sm:$0xf]
        %v447 = vld [vmem:[#allocation6 + $0x34] sm:$0xf]
        %v448 = vld [vmem:[#allocation6 + $0x38] sm:$0xf]
        %v449 = vld [vmem:[#allocation6 + $0x3c] sm:$0xf]
        %v450 = vld [vmem:[#allocation2 + $0x1] sm:$0xff]
        %v451 = vld [vmem:[#allocation2 + $0x11] sm:$0xff]
        %v452 = vld [vmem:[#allocation2 + $0x21] sm:$0xff]
        %v453 = vld [vmem:[#allocation2 + $0x31] sm:$0xff]
        %v454 = vld [vmem:[#allocation2 + $0x41] sm:$0xff]
        %v455 = vld [vmem:[#allocation2 + $0x51] sm:$0xff]
        %v456 = vld [vmem:[#allocation2 + $0x61] sm:$0xff]
        %v457 = vld [vmem:[#allocation2 + $0x71] sm:$0xff]
        %v458 = vpack.c.bf16 %v451, %v450
        %v459 = vpack.c.bf16 %v453, %v452
        %v460 = vpack.c.bf16 %v455, %v454
        %v461 = vpack.c.bf16 %v457, %v456
        %s462 = scalar_lea.vmem [#allocation6], 64
        %v463 = vld [vmem:[%s462] sm:$0xf]
        %v464 = vld [vmem:[%s462 + $0x4] sm:$0xf]
        %v465 = vld [vmem:[%s462 + $0x8] sm:$0xf]
        %v466 = vld [vmem:[%s462 + $0xc] sm:$0xf]
        %v467 = vld [vmem:[%s462 + $0x10] sm:$0xf]
        %v468 = vld [vmem:[%s462 + $0x14] sm:$0xf]
        %v469 = vld [vmem:[%s462 + $0x18] sm:$0xf]
        %v470 = vld [vmem:[%s462 + $0x1c] sm:$0xf]
        %v471 = vld [vmem:[%s462 + $0x20] sm:$0xf]
        %v472 = vld [vmem:[%s462 + $0x24] sm:$0xf]
        %v473 = vld [vmem:[%s462 + $0x28] sm:$0xf]
        %v474 = vld [vmem:[%s462 + $0x2c] sm:$0xf]
        %v475 = vld [vmem:[%s462 + $0x30] sm:$0xf]
        %v476 = vld [vmem:[%s462 + $0x34] sm:$0xf]
        %v477 = vld [vmem:[%s462 + $0x38] sm:$0xf]
        %v478 = vld [vmem:[%s462 + $0x3c] sm:$0xf]
        %v495 = vunpack.c.l.b16 %v463
        %v496 = vunpack.c.l.b16 %v464
        %v497 = vunpack.c.l.b16 %v465
        %v498 = vunpack.c.l.b16 %v466
        %v499 = vunpack.c.l.b16 %v467
        %v500 = vunpack.c.l.b16 %v468
        %v501 = vunpack.c.l.b16 %v469
        %v502 = vunpack.c.l.b16 %v470
        %v503 = vunpack.c.l.b16 %v471
        %v504 = vunpack.c.l.b16 %v472
        %v505 = vunpack.c.l.b16 %v473
        %v506 = vunpack.c.l.b16 %v474
        %v507 = vunpack.c.l.b16 %v475
        %v508 = vunpack.c.l.b16 %v476
        %v509 = vunpack.c.l.b16 %v477
        %v510 = vunpack.c.l.b16 %v478
        %v511 = vpack.c.b16 %v496, %v495
        %v512 = vpack.c.b16 %v498, %v497
        %v513 = vpack.c.b16 %v500, %v499
        %v514 = vpack.c.b16 %v502, %v501
        %v515 = vpack.c.b16 %v504, %v503
        %v516 = vpack.c.b16 %v506, %v505
        %v517 = vpack.c.b16 %v508, %v507
        %v518 = vpack.c.b16 %v510, %v509
        %527 = vmatpush.bf16.msra.mxu0 %v518
        %528 = vmatpush.bf16.msra.mxu0 %v517
        %529 = vmatpush.bf16.msra.mxu0 %v516
        %530 = vmatpush.bf16.msra.mxu0 %v515
        %531 = vmatpush.bf16.msra.mxu0 %v514
        %532 = vmatpush.bf16.msra.mxu0 %v513
        %533 = vmatpush.bf16.msra.mxu0 %v512
        %534 = vmatpush.bf16.msra.mxu0 %v511
        %535 = vmatmul.bf16.gmra.mxu0 %v458
        %v536 = vpop.f32.mrf.mxu0
        %v537 = vadd.f32 0.0, %v536
        %v538 = vpop.f32.mrf.mxu0
        %v539 = vadd.f32 0.0, %v538
        %540 = vmatmul.bf16.gmra.mxu0 %v459
        %v541 = vpop.f32.mrf.mxu0
        %v542 = vadd.f32 0.0, %v541
        %v543 = vpop.f32.mrf.mxu0
        %v544 = vadd.f32 0.0, %v543
        %545 = vmatmul.bf16.gmra.mxu0 %v460
        %v546 = vpop.f32.mrf.mxu0
        %v547 = vadd.f32 0.0, %v546
        %v548 = vpop.f32.mrf.mxu0
        %v549 = vadd.f32 0.0, %v548
        %550 = vmatmul.bf16.gmra.mxu0 %v461
        %v551 = vpop.f32.mrf.mxu0
        %v552 = vadd.f32 0.0, %v551
        %v553 = vpop.f32.mrf.mxu0
        %v554 = vadd.f32 0.0, %v553
        %555 = vdwg.mxu0
        %v572 = vunpack.c.l.b16 %v434
        %v573 = vunpack.c.l.b16 %v435
        %v574 = vunpack.c.l.b16 %v436
        %v575 = vunpack.c.l.b16 %v437
        %v576 = vunpack.c.l.b16 %v438
        %v577 = vunpack.c.l.b16 %v439
        %v578 = vunpack.c.l.b16 %v440
        %v579 = vunpack.c.l.b16 %v441
        %v580 = vunpack.c.l.b16 %v442
        %v581 = vunpack.c.l.b16 %v443
        %v582 = vunpack.c.l.b16 %v444
        %v583 = vunpack.c.l.b16 %v445
        %v584 = vunpack.c.l.b16 %v446
        %v585 = vunpack.c.l.b16 %v447
        %v586 = vunpack.c.l.b16 %v448
        %v587 = vunpack.c.l.b16 %v449
        %v588 = vpack.c.b16 %v573, %v572
        %v589 = vpack.c.b16 %v575, %v574
        %v590 = vpack.c.b16 %v577, %v576
        %v591 = vpack.c.b16 %v579, %v578
        %v592 = vpack.c.b16 %v581, %v580
        %v593 = vpack.c.b16 %v583, %v582
        %v594 = vpack.c.b16 %v585, %v584
        %v595 = vpack.c.b16 %v587, %v586
        %604 = vmatpush.bf16.msra.mxu0 %v595
        %605 = vmatpush.bf16.msra.mxu0 %v594
        %606 = vmatpush.bf16.msra.mxu0 %v593
        %607 = vmatpush.bf16.msra.mxu0 %v592
        %608 = vmatpush.bf16.msra.mxu0 %v591
        %609 = vmatpush.bf16.msra.mxu0 %v590
        %610 = vmatpush.bf16.msra.mxu0 %v589
        %611 = vmatpush.bf16.msra.mxu0 %v588
        %612 = vmatmul.bf16.gmra.mxu0 %v430
        %v613 = vpop.f32.mrf.mxu0
        %v614 = vadd.f32 %v537, %v613
        %v615 = vpop.f32.mrf.mxu0
        %v616 = vadd.f32 %v539, %v615
        %617 = vmatmul.bf16.gmra.mxu0 %v431
        %v618 = vpop.f32.mrf.mxu0
        %v619 = vadd.f32 %v542, %v618
        %v620 = vpop.f32.mrf.mxu0
        %v621 = vadd.f32 %v544, %v620
        %622 = vmatmul.bf16.gmra.mxu0 %v432
        %v623 = vpop.f32.mrf.mxu0
        %v624 = vadd.f32 %v547, %v623
        %v625 = vpop.f32.mrf.mxu0
        %v626 = vadd.f32 %v549, %v625
        %627 = vmatmul.bf16.gmra.mxu0 %v433
        %v628 = vpop.f32.mrf.mxu0
        %v629 = vadd.f32 %v552, %v628
        %v630 = vpop.f32.mrf.mxu0
        %v631 = vadd.f32 %v554, %v630
        %632 = vdwg.mxu0
        %v633 = vld [vmem:[#allocation2 + $0x2] sm:$0xff]
        %v634 = vld [vmem:[#allocation2 + $0x12] sm:$0xff]
        %v635 = vld [vmem:[#allocation2 + $0x22] sm:$0xff]
        %v636 = vld [vmem:[#allocation2 + $0x32] sm:$0xff]
        %v637 = vld [vmem:[#allocation2 + $0x42] sm:$0xff]
        %v638 = vld [vmem:[#allocation2 + $0x52] sm:$0xff]
        %v639 = vld [vmem:[#allocation2 + $0x62] sm:$0xff]
        %v640 = vld [vmem:[#allocation2 + $0x72] sm:$0xff]
        %v641 = vpack.c.bf16 %v634, %v633
        %v642 = vpack.c.bf16 %v636, %v635
        %v643 = vpack.c.bf16 %v638, %v637
        %v644 = vpack.c.bf16 %v640, %v639
        %s645 = scalar_lea.vmem [#allocation6], 128
        %v646 = vld [vmem:[%s645] sm:$0xf]
        %v647 = vld [vmem:[%s645 + $0x4] sm:$0xf]
        %v648 = vld [vmem:[%s645 + $0x8] sm:$0xf]
        %v649 = vld [vmem:[%s645 + $0xc] sm:$0xf]
        %v650 = vld [vmem:[%s645 + $0x10] sm:$0xf]
        %v651 = vld [vmem:[%s645 + $0x14] sm:$0xf]
        %v652 = vld [vmem:[%s645 + $0x18] sm:$0xf]
        %v653 = vld [vmem:[%s645 + $0x1c] sm:$0xf]
        %v654 = vld [vmem:[%s645 + $0x20] sm:$0xf]
        %v655 = vld [vmem:[%s645 + $0x24] sm:$0xf]
        %v656 = vld [vmem:[%s645 + $0x28] sm:$0xf]
        %v657 = vld [vmem:[%s645 + $0x2c] sm:$0xf]
        %v658 = vld [vmem:[%s645 + $0x30] sm:$0xf]
        %v659 = vld [vmem:[%s645 + $0x34] sm:$0xf]
        %v660 = vld [vmem:[%s645 + $0x38] sm:$0xf]
        %v661 = vld [vmem:[%s645 + $0x3c] sm:$0xf]
        %v678 = vunpack.c.l.b16 %v646
        %v679 = vunpack.c.l.b16 %v647
        %v680 = vunpack.c.l.b16 %v648
        %v681 = vunpack.c.l.b16 %v649
        %v682 = vunpack.c.l.b16 %v650
        %v683 = vunpack.c.l.b16 %v651
        %v684 = vunpack.c.l.b16 %v652
        %v685 = vunpack.c.l.b16 %v653
        %v686 = vunpack.c.l.b16 %v654
        %v687 = vunpack.c.l.b16 %v655
        %v688 = vunpack.c.l.b16 %v656
        %v689 = vunpack.c.l.b16 %v657
        %v690 = vunpack.c.l.b16 %v658
        %v691 = vunpack.c.l.b16 %v659
        %v692 = vunpack.c.l.b16 %v660
        %v693 = vunpack.c.l.b16 %v661
        %v694 = vpack.c.b16 %v679, %v678
        %v695 = vpack.c.b16 %v681, %v680
        %v696 = vpack.c.b16 %v683, %v682
        %v697 = vpack.c.b16 %v685, %v684
        %v698 = vpack.c.b16 %v687, %v686
        %v699 = vpack.c.b16 %v689, %v688
        %v700 = vpack.c.b16 %v691, %v690
        %v701 = vpack.c.b16 %v693, %v692
        %710 = vmatpush.bf16.msra.mxu0 %v701
        %711 = vmatpush.bf16.msra.mxu0 %v700
        %712 = vmatpush.bf16.msra.mxu0 %v699
        %713 = vmatpush.bf16.msra.mxu0 %v698
        %714 = vmatpush.bf16.msra.mxu0 %v697
        %715 = vmatpush.bf16.msra.mxu0 %v696
        %716 = vmatpush.bf16.msra.mxu0 %v695
        %717 = vmatpush.bf16.msra.mxu0 %v694
        %718 = vmatmul.bf16.gmra.mxu0 %v641
        %v719 = vpop.f32.mrf.mxu0
        %v720 = vadd.f32 0.0, %v719
        %v721 = vpop.f32.mrf.mxu0
        %v722 = vadd.f32 0.0, %v721
        %723 = vmatmul.bf16.gmra.mxu0 %v642
        %v724 = vpop.f32.mrf.mxu0
        %v725 = vadd.f32 0.0, %v724
        %v726 = vpop.f32.mrf.mxu0
        %v727 = vadd.f32 0.0, %v726
        %728 = vmatmul.bf16.gmra.mxu0 %v643
        %v729 = vpop.f32.mrf.mxu0
        %v730 = vadd.f32 0.0, %v729
        %v731 = vpop.f32.mrf.mxu0
        %v732 = vadd.f32 0.0, %v731
        %733 = vmatmul.bf16.gmra.mxu0 %v644
        %v734 = vpop.f32.mrf.mxu0
        %v735 = vadd.f32 0.0, %v734
        %v736 = vpop.f32.mrf.mxu0
        %v737 = vadd.f32 0.0, %v736
        %738 = vdwg.mxu0
        %v739 = vadd.f32 %v614, %v720
        %v740 = vadd.f32 %v616, %v722
        %v741 = vadd.f32 %v619, %v725
        %v742 = vadd.f32 %v621, %v727
        %v743 = vadd.f32 %v624, %v730
        %v744 = vadd.f32 %v626, %v732
        %v745 = vadd.f32 %v629, %v735
        %v746 = vadd.f32 %v631, %v737
        %v747 = vld [vmem:[%s413] sm:$0xff]
        %v748 = vld [vmem:[%s413 + $0x10] sm:$0xff]
        %v749 = vld [vmem:[%s413 + $0x20] sm:$0xff]
        %v750 = vld [vmem:[%s413 + $0x30] sm:$0xff]
        %v751 = vld [vmem:[%s413 + $0x40] sm:$0xff]
        %v752 = vld [vmem:[%s413 + $0x50] sm:$0xff]
        %v753 = vld [vmem:[%s413 + $0x60] sm:$0xff]
        %v754 = vld [vmem:[%s413 + $0x70] sm:$0xff]
        %v755 = vpack.c.bf16 %v748, %v747
        %v756 = vpack.c.bf16 %v750, %v749
        %v757 = vpack.c.bf16 %v752, %v751
        %v758 = vpack.c.bf16 %v754, %v753
        %s759 = scalar_lea.vmem [#allocation6], 192
        %v760 = vld [vmem:[%s759] sm:$0xf]
        %v761 = vld [vmem:[%s759 + $0x4] sm:$0xf]
        %v762 = vld [vmem:[%s759 + $0x8] sm:$0xf]
        %v763 = vld [vmem:[%s759 + $0xc] sm:$0xf]
        %v764 = vld [vmem:[%s759 + $0x10] sm:$0xf]
        %v765 = vld [vmem:[%s759 + $0x14] sm:$0xf]
        %v766 = vld [vmem:[%s759 + $0x18] sm:$0xf]
        %v767 = vld [vmem:[%s759 + $0x1c] sm:$0xf]
        %v768 = vld [vmem:[%s759 + $0x20] sm:$0xf]
        %v769 = vld [vmem:[%s759 + $0x24] sm:$0xf]
        %v770 = vld [vmem:[%s759 + $0x28] sm:$0xf]
        %v771 = vld [vmem:[%s759 + $0x2c] sm:$0xf]
        %v772 = vld [vmem:[%s759 + $0x30] sm:$0xf]
        %v773 = vld [vmem:[%s759 + $0x34] sm:$0xf]
        %v774 = vld [vmem:[%s759 + $0x38] sm:$0xf]
        %v775 = vld [vmem:[%s759 + $0x3c] sm:$0xf]
        %v792 = vunpack.c.l.b16 %v760
        %v793 = vunpack.c.l.b16 %v761
        %v794 = vunpack.c.l.b16 %v762
        %v795 = vunpack.c.l.b16 %v763
        %v796 = vunpack.c.l.b16 %v764
        %v797 = vunpack.c.l.b16 %v765
        %v798 = vunpack.c.l.b16 %v766
        %v799 = vunpack.c.l.b16 %v767
        %v800 = vunpack.c.l.b16 %v768
        %v801 = vunpack.c.l.b16 %v769
        %v802 = vunpack.c.l.b16 %v770
        %v803 = vunpack.c.l.b16 %v771
        %v804 = vunpack.c.l.b16 %v772
        %v805 = vunpack.c.l.b16 %v773
        %v806 = vunpack.c.l.b16 %v774
        %v807 = vunpack.c.l.b16 %v775
        %v808 = vpack.c.b16 %v793, %v792
        %v809 = vpack.c.b16 %v795, %v794
        %v810 = vpack.c.b16 %v797, %v796
        %v811 = vpack.c.b16 %v799, %v798
        %v812 = vpack.c.b16 %v801, %v800
        %v813 = vpack.c.b16 %v803, %v802
        %v814 = vpack.c.b16 %v805, %v804
        %v815 = vpack.c.b16 %v807, %v806
        %824 = vmatpush.bf16.msra.mxu0 %v815
        %825 = vmatpush.bf16.msra.mxu0 %v814
        %826 = vmatpush.bf16.msra.mxu0 %v813
        %827 = vmatpush.bf16.msra.mxu0 %v812
        %828 = vmatpush.bf16.msra.mxu0 %v811
        %829 = vmatpush.bf16.msra.mxu0 %v810
        %830 = vmatpush.bf16.msra.mxu0 %v809
        %831 = vmatpush.bf16.msra.mxu0 %v808
        %832 = vmatmul.bf16.gmra.mxu0 %v755
        %v833 = vpop.f32.mrf.mxu0
        %v834 = vadd.f32 0.0, %v833
        %v835 = vpop.f32.mrf.mxu0
        %v836 = vadd.f32 0.0, %v835
        %837 = vmatmul.bf16.gmra.mxu0 %v756
        %v838 = vpop.f32.mrf.mxu0
        %v839 = vadd.f32 0.0, %v838
        %v840 = vpop.f32.mrf.mxu0
        %v841 = vadd.f32 0.0, %v840
        %842 = vmatmul.bf16.gmra.mxu0 %v757
        %v843 = vpop.f32.mrf.mxu0
        %v844 = vadd.f32 0.0, %v843
        %v845 = vpop.f32.mrf.mxu0
        %v846 = vadd.f32 0.0, %v845
        %847 = vmatmul.bf16.gmra.mxu0 %v758
        %v848 = vpop.f32.mrf.mxu0
        %v849 = vadd.f32 0.0, %v848
        %v850 = vpop.f32.mrf.mxu0
        %v851 = vadd.f32 0.0, %v850
        %852 = vdwg.mxu0
        %v853 = vadd.f32 %v739, %v834
        %v854 = vadd.f32 %v740, %v836
        %v855 = vadd.f32 %v741, %v839
        %v856 = vadd.f32 %v742, %v841
        %v857 = vadd.f32 %v743, %v844
        %v858 = vadd.f32 %v744, %v846
        %v859 = vadd.f32 %v745, %v849
        %v860 = vadd.f32 %v746, %v851
        %v861 = vld [vmem:[%s413 + $0x1] sm:$0xff]
        %v862 = vld [vmem:[%s413 + $0x11] sm:$0xff]
        %v863 = vld [vmem:[%s413 + $0x21] sm:$0xff]
        %v864 = vld [vmem:[%s413 + $0x31] sm:$0xff]
        %v865 = vld [vmem:[%s413 + $0x41] sm:$0xff]
        %v866 = vld [vmem:[%s413 + $0x51] sm:$0xff]
        %v867 = vld [vmem:[%s413 + $0x61] sm:$0xff]
        %v868 = vld [vmem:[%s413 + $0x71] sm:$0xff]
        %v869 = vpack.c.bf16 %v862, %v861
        %v870 = vpack.c.bf16 %v864, %v863
        %v871 = vpack.c.bf16 %v866, %v865
        %v872 = vpack.c.bf16 %v868, %v867
        %s873 = scalar_lea.vmem [#allocation6], 256
        %v874 = vld [vmem:[%s873] sm:$0xf]
        %v875 = vld [vmem:[%s873 + $0x4] sm:$0xf]
        %v876 = vld [vmem:[%s873 + $0x8] sm:$0xf]
        %v877 = vld [vmem:[%s873 + $0xc] sm:$0xf]
        %v878 = vld [vmem:[%s873 + $0x10] sm:$0xf]
        %v879 = vld [vmem:[%s873 + $0x14] sm:$0xf]
        %v880 = vld [vmem:[%s873 + $0x18] sm:$0xf]
        %v881 = vld [vmem:[%s873 + $0x1c] sm:$0xf]
        %v882 = vld [vmem:[%s873 + $0x20] sm:$0xf]
        %v883 = vld [vmem:[%s873 + $0x24] sm:$0xf]
        %v884 = vld [vmem:[%s873 + $0x28] sm:$0xf]
        %v885 = vld [vmem:[%s873 + $0x2c] sm:$0xf]
        %v886 = vld [vmem:[%s873 + $0x30] sm:$0xf]
        %v887 = vld [vmem:[%s873 + $0x34] sm:$0xf]
        %v888 = vld [vmem:[%s873 + $0x38] sm:$0xf]
        %v889 = vld [vmem:[%s873 + $0x3c] sm:$0xf]
        %v906 = vunpack.c.l.b16 %v874
        %v907 = vunpack.c.l.b16 %v875
        %v908 = vunpack.c.l.b16 %v876
        %v909 = vunpack.c.l.b16 %v877
        %v910 = vunpack.c.l.b16 %v878
        %v911 = vunpack.c.l.b16 %v879
        %v912 = vunpack.c.l.b16 %v880
        %v913 = vunpack.c.l.b16 %v881
        %v914 = vunpack.c.l.b16 %v882
        %v915 = vunpack.c.l.b16 %v883
        %v916 = vunpack.c.l.b16 %v884
        %v917 = vunpack.c.l.b16 %v885
        %v918 = vunpack.c.l.b16 %v886
        %v919 = vunpack.c.l.b16 %v887
        %v920 = vunpack.c.l.b16 %v888
        %v921 = vunpack.c.l.b16 %v889
        %v922 = vpack.c.b16 %v907, %v906
        %v923 = vpack.c.b16 %v909, %v908
        %v924 = vpack.c.b16 %v911, %v910
        %v925 = vpack.c.b16 %v913, %v912
        %v926 = vpack.c.b16 %v915, %v914
        %v927 = vpack.c.b16 %v917, %v916
        %v928 = vpack.c.b16 %v919, %v918
        %v929 = vpack.c.b16 %v921, %v920
        %938 = vmatpush.bf16.msra.mxu0 %v929
        %939 = vmatpush.bf16.msra.mxu0 %v928
        %940 = vmatpush.bf16.msra.mxu0 %v927
        %941 = vmatpush.bf16.msra.mxu0 %v926
        %942 = vmatpush.bf16.msra.mxu0 %v925
        %943 = vmatpush.bf16.msra.mxu0 %v924
        %944 = vmatpush.bf16.msra.mxu0 %v923
        %945 = vmatpush.bf16.msra.mxu0 %v922
        %946 = vmatmul.bf16.gmra.mxu0 %v869
        %v947 = vpop.f32.mrf.mxu0
        %v948 = vadd.f32 0.0, %v947
        %v949 = vpop.f32.mrf.mxu0
        %v950 = vadd.f32 0.0, %v949
        %951 = vmatmul.bf16.gmra.mxu0 %v870
        %v952 = vpop.f32.mrf.mxu0
        %v953 = vadd.f32 0.0, %v952
        %v954 = vpop.f32.mrf.mxu0
        %v955 = vadd.f32 0.0, %v954
        %956 = vmatmul.bf16.gmra.mxu0 %v871
        %v957 = vpop.f32.mrf.mxu0
        %v958 = vadd.f32 0.0, %v957
        %v959 = vpop.f32.mrf.mxu0
        %v960 = vadd.f32 0.0, %v959
        %961 = vmatmul.bf16.gmra.mxu0 %v872
        %v962 = vpop.f32.mrf.mxu0
        %v963 = vadd.f32 0.0, %v962
        %v964 = vpop.f32.mrf.mxu0
        %v965 = vadd.f32 0.0, %v964
        %966 = vdwg.mxu0
        %v967 = vadd.f32 %v853, %v948
        %v968 = vadd.f32 %v854, %v950
        %v969 = vadd.f32 %v855, %v953
        %v970 = vadd.f32 %v856, %v955
        %v971 = vadd.f32 %v857, %v958
        %v972 = vadd.f32 %v858, %v960
        %v973 = vadd.f32 %v859, %v963
        %v974 = vadd.f32 %v860, %v965
        %v975 = vld [vmem:[%s413 + $0x2] sm:$0xff]
        %v976 = vld [vmem:[%s413 + $0x12] sm:$0xff]
        %v977 = vld [vmem:[%s413 + $0x22] sm:$0xff]
        %v978 = vld [vmem:[%s413 + $0x32] sm:$0xff]
        %v979 = vld [vmem:[%s413 + $0x42] sm:$0xff]
        %v980 = vld [vmem:[%s413 + $0x52] sm:$0xff]
        %v981 = vld [vmem:[%s413 + $0x62] sm:$0xff]
        %v982 = vld [vmem:[%s413 + $0x72] sm:$0xff]
        %v983 = vpack.c.bf16 %v976, %v975
        %v984 = vpack.c.bf16 %v978, %v977
        %v985 = vpack.c.bf16 %v980, %v979
        %v986 = vpack.c.bf16 %v982, %v981
        %s987 = scalar_lea.vmem [#allocation6], 320
        %v988 = vld [vmem:[%s987] sm:$0xf]
        %v989 = vld [vmem:[%s987 + $0x4] sm:$0xf]
        %v990 = vld [vmem:[%s987 + $0x8] sm:$0xf]
        %v991 = vld [vmem:[%s987 + $0xc] sm:$0xf]
        %v992 = vld [vmem:[%s987 + $0x10] sm:$0xf]
        %v993 = vld [vmem:[%s987 + $0x14] sm:$0xf]
        %v994 = vld [vmem:[%s987 + $0x18] sm:$0xf]
        %v995 = vld [vmem:[%s987 + $0x1c] sm:$0xf]
        %v996 = vld [vmem:[%s987 + $0x20] sm:$0xf]
        %v997 = vld [vmem:[%s987 + $0x24] sm:$0xf]
        %v998 = vld [vmem:[%s987 + $0x28] sm:$0xf]
        %v999 = vld [vmem:[%s987 + $0x2c] sm:$0xf]
        %v1000 = vld [vmem:[%s987 + $0x30] sm:$0xf]
        %v1001 = vld [vmem:[%s987 + $0x34] sm:$0xf]
        %v1002 = vld [vmem:[%s987 + $0x38] sm:$0xf]
        %v1003 = vld [vmem:[%s987 + $0x3c] sm:$0xf]
        %v1020 = vunpack.c.l.b16 %v988
        %v1021 = vunpack.c.l.b16 %v989
        %v1022 = vunpack.c.l.b16 %v990
        %v1023 = vunpack.c.l.b16 %v991
        %v1024 = vunpack.c.l.b16 %v992
        %v1025 = vunpack.c.l.b16 %v993
        %v1026 = vunpack.c.l.b16 %v994
        %v1027 = vunpack.c.l.b16 %v995
        %v1028 = vunpack.c.l.b16 %v996
        %v1029 = vunpack.c.l.b16 %v997
        %v1030 = vunpack.c.l.b16 %v998
        %v1031 = vunpack.c.l.b16 %v999
        %v1032 = vunpack.c.l.b16 %v1000
        %v1033 = vunpack.c.l.b16 %v1001
        %v1034 = vunpack.c.l.b16 %v1002
        %v1035 = vunpack.c.l.b16 %v1003
        %v1036 = vpack.c.b16 %v1021, %v1020
        %v1037 = vpack.c.b16 %v1023, %v1022
        %v1038 = vpack.c.b16 %v1025, %v1024
        %v1039 = vpack.c.b16 %v1027, %v1026
        %v1040 = vpack.c.b16 %v1029, %v1028
        %v1041 = vpack.c.b16 %v1031, %v1030
        %v1042 = vpack.c.b16 %v1033, %v1032
        %v1043 = vpack.c.b16 %v1035, %v1034
        %1052 = vmatpush.bf16.msra.mxu0 %v1043
        %1053 = vmatpush.bf16.msra.mxu0 %v1042
        %1054 = vmatpush.bf16.msra.mxu0 %v1041
        %1055 = vmatpush.bf16.msra.mxu0 %v1040
        %1056 = vmatpush.bf16.msra.mxu0 %v1039
        %1057 = vmatpush.bf16.msra.mxu0 %v1038
        %1058 = vmatpush.bf16.msra.mxu0 %v1037
        %1059 = vmatpush.bf16.msra.mxu0 %v1036
        %1060 = vmatmul.bf16.gmra.mxu0 %v983
        %v1061 = vpop.f32.mrf.mxu0
        %v1062 = vadd.f32 0.0, %v1061
        %v1063 = vpop.f32.mrf.mxu0
        %v1064 = vadd.f32 0.0, %v1063
        %1065 = vmatmul.bf16.gmra.mxu0 %v984
        %v1066 = vpop.f32.mrf.mxu0
        %v1067 = vadd.f32 0.0, %v1066
        %v1068 = vpop.f32.mrf.mxu0
        %v1069 = vadd.f32 0.0, %v1068
        %1070 = vmatmul.bf16.gmra.mxu0 %v985
        %v1071 = vpop.f32.mrf.mxu0
        %v1072 = vadd.f32 0.0, %v1071
        %v1073 = vpop.f32.mrf.mxu0
        %v1074 = vadd.f32 0.0, %v1073
        %1075 = vmatmul.bf16.gmra.mxu0 %v986
        %v1076 = vpop.f32.mrf.mxu0
        %v1077 = vadd.f32 0.0, %v1076
        %v1078 = vpop.f32.mrf.mxu0
        %v1079 = vadd.f32 0.0, %v1078
        %1080 = vdwg.mxu0
        %v1081 = vadd.f32 %v967, %v1062
        %v1082 = vadd.f32 %v968, %v1064
        %v1083 = vadd.f32 %v969, %v1067
        %v1084 = vadd.f32 %v970, %v1069
        %v1085 = vadd.f32 %v971, %v1072
        %v1086 = vadd.f32 %v972, %v1074
        %v1087 = vadd.f32 %v973, %v1077
        %v1088 = vadd.f32 %v974, %v1079
        %s1089 = scalar_lea.vmem [#allocation2], 32
        %v1090 = vld [vmem:[%s1089] sm:$0xff]
        %v1091 = vld [vmem:[%s1089 + $0x10] sm:$0xff]
        %v1092 = vld [vmem:[%s1089 + $0x20] sm:$0xff]
        %v1093 = vld [vmem:[%s1089 + $0x30] sm:$0xff]
        %v1094 = vld [vmem:[%s1089 + $0x40] sm:$0xff]
        %v1095 = vld [vmem:[%s1089 + $0x50] sm:$0xff]
        %v1096 = vld [vmem:[%s1089 + $0x60] sm:$0xff]
        %v1097 = vld [vmem:[%s1089 + $0x70] sm:$0xff]
        %v1098 = vpack.c.bf16 %v1091, %v1090
        %v1099 = vpack.c.bf16 %v1093, %v1092
        %v1100 = vpack.c.bf16 %v1095, %v1094
        %v1101 = vpack.c.bf16 %v1097, %v1096
        %s1102 = scalar_lea.vmem [#allocation6], 384
        %v1103 = vld [vmem:[%s1102] sm:$0xf]
        %v1104 = vld [vmem:[%s1102 + $0x4] sm:$0xf]
        %v1105 = vld [vmem:[%s1102 + $0x8] sm:$0xf]
        %v1106 = vld [vmem:[%s1102 + $0xc] sm:$0xf]
        %v1107 = vld [vmem:[%s1102 + $0x10] sm:$0xf]
        %v1108 = vld [vmem:[%s1102 + $0x14] sm:$0xf]
        %v1109 = vld [vmem:[%s1102 + $0x18] sm:$0xf]
        %v1110 = vld [vmem:[%s1102 + $0x1c] sm:$0xf]
        %v1111 = vld [vmem:[%s1102 + $0x20] sm:$0xf]
        %v1112 = vld [vmem:[%s1102 + $0x24] sm:$0xf]
        %v1113 = vld [vmem:[%s1102 + $0x28] sm:$0xf]
        %v1114 = vld [vmem:[%s1102 + $0x2c] sm:$0xf]
        %v1115 = vld [vmem:[%s1102 + $0x30] sm:$0xf]
        %v1116 = vld [vmem:[%s1102 + $0x34] sm:$0xf]
        %v1117 = vld [vmem:[%s1102 + $0x38] sm:$0xf]
        %v1118 = vld [vmem:[%s1102 + $0x3c] sm:$0xf]
        %v1135 = vunpack.c.l.b16 %v1103
        %v1136 = vunpack.c.l.b16 %v1104
        %v1137 = vunpack.c.l.b16 %v1105
        %v1138 = vunpack.c.l.b16 %v1106
        %v1139 = vunpack.c.l.b16 %v1107
        %v1140 = vunpack.c.l.b16 %v1108
        %v1141 = vunpack.c.l.b16 %v1109
        %v1142 = vunpack.c.l.b16 %v1110
        %v1143 = vunpack.c.l.b16 %v1111
        %v1144 = vunpack.c.l.b16 %v1112
        %v1145 = vunpack.c.l.b16 %v1113
        %v1146 = vunpack.c.l.b16 %v1114
        %v1147 = vunpack.c.l.b16 %v1115
        %v1148 = vunpack.c.l.b16 %v1116
        %v1149 = vunpack.c.l.b16 %v1117
        %v1150 = vunpack.c.l.b16 %v1118
        %v1151 = vpack.c.b16 %v1136, %v1135
        %v1152 = vpack.c.b16 %v1138, %v1137
        %v1153 = vpack.c.b16 %v1140, %v1139
        %v1154 = vpack.c.b16 %v1142, %v1141
        %v1155 = vpack.c.b16 %v1144, %v1143
        %v1156 = vpack.c.b16 %v1146, %v1145
        %v1157 = vpack.c.b16 %v1148, %v1147
        %v1158 = vpack.c.b16 %v1150, %v1149
        %1167 = vmatpush.bf16.msra.mxu0 %v1158
        %1168 = vmatpush.bf16.msra.mxu0 %v1157
        %1169 = vmatpush.bf16.msra.mxu0 %v1156
        %1170 = vmatpush.bf16.msra.mxu0 %v1155
        %1171 = vmatpush.bf16.msra.mxu0 %v1154
        %1172 = vmatpush.bf16.msra.mxu0 %v1153
        %1173 = vmatpush.bf16.msra.mxu0 %v1152
        %1174 = vmatpush.bf16.msra.mxu0 %v1151
        %1175 = vmatmul.bf16.gmra.mxu0 %v1098
        %v1176 = vpop.f32.mrf.mxu0
        %v1177 = vadd.f32 0.0, %v1176
        %v1178 = vpop.f32.mrf.mxu0
        %v1179 = vadd.f32 0.0, %v1178
        %1180 = vmatmul.bf16.gmra.mxu0 %v1099
        %v1181 = vpop.f32.mrf.mxu0
        %v1182 = vadd.f32 0.0, %v1181
        %v1183 = vpop.f32.mrf.mxu0
        %v1184 = vadd.f32 0.0, %v1183
        %1185 = vmatmul.bf16.gmra.mxu0 %v1100
        %v1186 = vpop.f32.mrf.mxu0
        %v1187 = vadd.f32 0.0, %v1186
        %v1188 = vpop.f32.mrf.mxu0
        %v1189 = vadd.f32 0.0, %v1188
        %1190 = vmatmul.bf16.gmra.mxu0 %v1101
        %v1191 = vpop.f32.mrf.mxu0
        %v1192 = vadd.f32 0.0, %v1191
        %v1193 = vpop.f32.mrf.mxu0
        %v1194 = vadd.f32 0.0, %v1193
        %1195 = vdwg.mxu0
        %v1196 = vadd.f32 %v1081, %v1177
        %v1197 = vadd.f32 %v1082, %v1179
        %v1198 = vadd.f32 %v1083, %v1182
        %v1199 = vadd.f32 %v1084, %v1184
        %v1200 = vadd.f32 %v1085, %v1187
        %v1201 = vadd.f32 %v1086, %v1189
        %v1202 = vadd.f32 %v1087, %v1192
        %v1203 = vadd.f32 %v1088, %v1194
        %v1204 = vld [vmem:[%s1089 + $0x1] sm:$0xff]
        %v1205 = vld [vmem:[%s1089 + $0x11] sm:$0xff]
        %v1206 = vld [vmem:[%s1089 + $0x21] sm:$0xff]
        %v1207 = vld [vmem:[%s1089 + $0x31] sm:$0xff]
        %v1208 = vld [vmem:[%s1089 + $0x41] sm:$0xff]
        %v1209 = vld [vmem:[%s1089 + $0x51] sm:$0xff]
        %v1210 = vld [vmem:[%s1089 + $0x61] sm:$0xff]
        %v1211 = vld [vmem:[%s1089 + $0x71] sm:$0xff]
        %v1212 = vpack.c.bf16 %v1205, %v1204
        %v1213 = vpack.c.bf16 %v1207, %v1206
        %v1214 = vpack.c.bf16 %v1209, %v1208
        %v1215 = vpack.c.bf16 %v1211, %v1210
        %s1216 = scalar_lea.vmem [#allocation6], 448
        %v1217 = vld [vmem:[%s1216] sm:$0xf]
        %v1218 = vld [vmem:[%s1216 + $0x4] sm:$0xf]
        %v1219 = vld [vmem:[%s1216 + $0x8] sm:$0xf]
        %v1220 = vld [vmem:[%s1216 + $0xc] sm:$0xf]
        %v1221 = vld [vmem:[%s1216 + $0x10] sm:$0xf]
        %v1222 = vld [vmem:[%s1216 + $0x14] sm:$0xf]
        %v1223 = vld [vmem:[%s1216 + $0x18] sm:$0xf]
        %v1224 = vld [vmem:[%s1216 + $0x1c] sm:$0xf]
        %v1225 = vld [vmem:[%s1216 + $0x20] sm:$0xf]
        %v1226 = vld [vmem:[%s1216 + $0x24] sm:$0xf]
        %v1227 = vld [vmem:[%s1216 + $0x28] sm:$0xf]
        %v1228 = vld [vmem:[%s1216 + $0x2c] sm:$0xf]
        %v1229 = vld [vmem:[%s1216 + $0x30] sm:$0xf]
        %v1230 = vld [vmem:[%s1216 + $0x34] sm:$0xf]
        %v1231 = vld [vmem:[%s1216 + $0x38] sm:$0xf]
        %v1232 = vld [vmem:[%s1216 + $0x3c] sm:$0xf]
        %v1249 = vunpack.c.l.b16 %v1217
        %v1250 = vunpack.c.l.b16 %v1218
        %v1251 = vunpack.c.l.b16 %v1219
        %v1252 = vunpack.c.l.b16 %v1220
        %v1253 = vunpack.c.l.b16 %v1221
        %v1254 = vunpack.c.l.b16 %v1222
        %v1255 = vunpack.c.l.b16 %v1223
        %v1256 = vunpack.c.l.b16 %v1224
        %v1257 = vunpack.c.l.b16 %v1225
        %v1258 = vunpack.c.l.b16 %v1226
        %v1259 = vunpack.c.l.b16 %v1227
        %v1260 = vunpack.c.l.b16 %v1228
        %v1261 = vunpack.c.l.b16 %v1229
        %v1262 = vunpack.c.l.b16 %v1230
        %v1263 = vunpack.c.l.b16 %v1231
        %v1264 = vunpack.c.l.b16 %v1232
        %v1265 = vpack.c.b16 %v1250, %v1249
        %v1266 = vpack.c.b16 %v1252, %v1251
        %v1267 = vpack.c.b16 %v1254, %v1253
        %v1268 = vpack.c.b16 %v1256, %v1255
        %v1269 = vpack.c.b16 %v1258, %v1257
        %v1270 = vpack.c.b16 %v1260, %v1259
        %v1271 = vpack.c.b16 %v1262, %v1261
        %v1272 = vpack.c.b16 %v1264, %v1263
        %1281 = vmatpush.bf16.msra.mxu0 %v1272
        %1282 = vmatpush.bf16.msra.mxu0 %v1271
        %1283 = vmatpush.bf16.msra.mxu0 %v1270
        %1284 = vmatpush.bf16.msra.mxu0 %v1269
        %1285 = vmatpush.bf16.msra.mxu0 %v1268
        %1286 = vmatpush.bf16.msra.mxu0 %v1267
        %1287 = vmatpush.bf16.msra.mxu0 %v1266
        %1288 = vmatpush.bf16.msra.mxu0 %v1265
        %1289 = vmatmul.bf16.gmra.mxu0 %v1212
        %v1290 = vpop.f32.mrf.mxu0
        %v1291 = vadd.f32 0.0, %v1290
        %v1292 = vpop.f32.mrf.mxu0
        %v1293 = vadd.f32 0.0, %v1292
        %1294 = vmatmul.bf16.gmra.mxu0 %v1213
        %v1295 = vpop.f32.mrf.mxu0
        %v1296 = vadd.f32 0.0, %v1295
        %v1297 = vpop.f32.mrf.mxu0
        %v1298 = vadd.f32 0.0, %v1297
        %1299 = vmatmul.bf16.gmra.mxu0 %v1214
        %v1300 = vpop.f32.mrf.mxu0
        %v1301 = vadd.f32 0.0, %v1300
        %v1302 = vpop.f32.mrf.mxu0
        %v1303 = vadd.f32 0.0, %v1302
        %1304 = vmatmul.bf16.gmra.mxu0 %v1215
        %v1305 = vpop.f32.mrf.mxu0
        %v1306 = vadd.f32 0.0, %v1305
        %v1307 = vpop.f32.mrf.mxu0
        %v1308 = vadd.f32 0.0, %v1307
        %1309 = vdwg.mxu0
        %v1310 = vadd.f32 %v1196, %v1291
        %v1311 = vadd.f32 %v1197, %v1293
        %v1312 = vadd.f32 %v1198, %v1296
        %v1313 = vadd.f32 %v1199, %v1298
        %v1314 = vadd.f32 %v1200, %v1301
        %v1315 = vadd.f32 %v1201, %v1303
        %v1316 = vadd.f32 %v1202, %v1306
        %v1317 = vadd.f32 %v1203, %v1308
        %v1318 = vld [vmem:[%s1089 + $0x2] sm:$0xff]
        %v1319 = vld [vmem:[%s1089 + $0x12] sm:$0xff]
        %v1320 = vld [vmem:[%s1089 + $0x22] sm:$0xff]
        %v1321 = vld [vmem:[%s1089 + $0x32] sm:$0xff]
        %v1322 = vld [vmem:[%s1089 + $0x42] sm:$0xff]
        %v1323 = vld [vmem:[%s1089 + $0x52] sm:$0xff]
        %v1324 = vld [vmem:[%s1089 + $0x62] sm:$0xff]
        %v1325 = vld [vmem:[%s1089 + $0x72] sm:$0xff]
        %v1326 = vpack.c.bf16 %v1319, %v1318
        %v1327 = vpack.c.bf16 %v1321, %v1320
        %v1328 = vpack.c.bf16 %v1323, %v1322
        %v1329 = vpack.c.bf16 %v1325, %v1324
        %s1330 = scalar_lea.vmem [#allocation6], 512
        %v1331 = vld [vmem:[%s1330] sm:$0xf]
        %v1332 = vld [vmem:[%s1330 + $0x4] sm:$0xf]
        %v1333 = vld [vmem:[%s1330 + $0x8] sm:$0xf]
        %v1334 = vld [vmem:[%s1330 + $0xc] sm:$0xf]
        %v1335 = vld [vmem:[%s1330 + $0x10] sm:$0xf]
        %v1336 = vld [vmem:[%s1330 + $0x14] sm:$0xf]
        %v1337 = vld [vmem:[%s1330 + $0x18] sm:$0xf]
        %v1338 = vld [vmem:[%s1330 + $0x1c] sm:$0xf]
        %v1339 = vld [vmem:[%s1330 + $0x20] sm:$0xf]
        %v1340 = vld [vmem:[%s1330 + $0x24] sm:$0xf]
        %v1341 = vld [vmem:[%s1330 + $0x28] sm:$0xf]
        %v1342 = vld [vmem:[%s1330 + $0x2c] sm:$0xf]
        %v1343 = vld [vmem:[%s1330 + $0x30] sm:$0xf]
        %v1344 = vld [vmem:[%s1330 + $0x34] sm:$0xf]
        %v1345 = vld [vmem:[%s1330 + $0x38] sm:$0xf]
        %v1346 = vld [vmem:[%s1330 + $0x3c] sm:$0xf]
        %v1363 = vunpack.c.l.b16 %v1331
        %v1364 = vunpack.c.l.b16 %v1332
        %v1365 = vunpack.c.l.b16 %v1333
        %v1366 = vunpack.c.l.b16 %v1334
        %v1367 = vunpack.c.l.b16 %v1335
        %v1368 = vunpack.c.l.b16 %v1336
        %v1369 = vunpack.c.l.b16 %v1337
        %v1370 = vunpack.c.l.b16 %v1338
        %v1371 = vunpack.c.l.b16 %v1339
        %v1372 = vunpack.c.l.b16 %v1340
        %v1373 = vunpack.c.l.b16 %v1341
        %v1374 = vunpack.c.l.b16 %v1342
        %v1375 = vunpack.c.l.b16 %v1343
        %v1376 = vunpack.c.l.b16 %v1344
        %v1377 = vunpack.c.l.b16 %v1345
        %v1378 = vunpack.c.l.b16 %v1346
        %v1379 = vpack.c.b16 %v1364, %v1363
        %v1380 = vpack.c.b16 %v1366, %v1365
        %v1381 = vpack.c.b16 %v1368, %v1367
        %v1382 = vpack.c.b16 %v1370, %v1369
        %v1383 = vpack.c.b16 %v1372, %v1371
        %v1384 = vpack.c.b16 %v1374, %v1373
        %v1385 = vpack.c.b16 %v1376, %v1375
        %v1386 = vpack.c.b16 %v1378, %v1377
        %1395 = vmatpush.bf16.msra.mxu0 %v1386
        %1396 = vmatpush.bf16.msra.mxu0 %v1385
        %1397 = vmatpush.bf16.msra.mxu0 %v1384
        %1398 = vmatpush.bf16.msra.mxu0 %v1383
        %1399 = vmatpush.bf16.msra.mxu0 %v1382
        %1400 = vmatpush.bf16.msra.mxu0 %v1381
        %1401 = vmatpush.bf16.msra.mxu0 %v1380
        %1402 = vmatpush.bf16.msra.mxu0 %v1379
        %1403 = vmatmul.bf16.gmra.mxu0 %v1326
        %v1404 = vpop.f32.mrf.mxu0
        %v1405 = vadd.f32 0.0, %v1404
        %v1406 = vpop.f32.mrf.mxu0
        %v1407 = vadd.f32 0.0, %v1406
        %1408 = vmatmul.bf16.gmra.mxu0 %v1327
        %v1409 = vpop.f32.mrf.mxu0
        %v1410 = vadd.f32 0.0, %v1409
        %v1411 = vpop.f32.mrf.mxu0
        %v1412 = vadd.f32 0.0, %v1411
        %1413 = vmatmul.bf16.gmra.mxu0 %v1328
        %v1414 = vpop.f32.mrf.mxu0
        %v1415 = vadd.f32 0.0, %v1414
        %v1416 = vpop.f32.mrf.mxu0
        %v1417 = vadd.f32 0.0, %v1416
        %1418 = vmatmul.bf16.gmra.mxu0 %v1329
        %v1419 = vpop.f32.mrf.mxu0
        %v1420 = vadd.f32 0.0, %v1419
        %v1421 = vpop.f32.mrf.mxu0
        %v1422 = vadd.f32 0.0, %v1421
        %1423 = vdwg.mxu0
        %v1424 = vadd.f32 %v1310, %v1405
        %v1425 = vadd.f32 %v1311, %v1407
        %v1426 = vadd.f32 %v1312, %v1410
        %v1427 = vadd.f32 %v1313, %v1412
        %v1428 = vadd.f32 %v1314, %v1415
        %v1429 = vadd.f32 %v1315, %v1417
        %v1430 = vadd.f32 %v1316, %v1420
        %v1431 = vadd.f32 %v1317, %v1422
        %v1432 = vld [vmem:[%s2] sm:$0x1]
        %v1434 = vperm.slane %v1432, 0
        %v1436 = vmul.f32 %v1424, %v1434
        %v1437 = vmul.f32 %v1425, %v1434
        %v1438 = vmul.f32 %v1426, %v1434
        %v1439 = vmul.f32 %v1427, %v1434
        %v1440 = vmul.f32 %v1428, %v1434
        %v1441 = vmul.f32 %v1429, %v1434
        %v1442 = vmul.f32 %v1430, %v1434
        %v1443 = vmul.f32 %v1431, %v1434
        %v1444 = vld [vmem:[%s3] sm:$0x1]
        %v1446 = vperm.slane %v1444, 0
        %v1448 = vadd.f32 %v1436, %v1446
        %v1449 = vadd.f32 %v1437, %v1446
        %v1450 = vadd.f32 %v1438, %v1446
        %v1451 = vadd.f32 %v1439, %v1446
        %v1452 = vadd.f32 %v1440, %v1446
        %v1453 = vadd.f32 %v1441, %v1446
        %v1454 = vadd.f32 %v1442, %v1446
        %v1455 = vadd.f32 %v1443, %v1446
        %v1456 = vmax.f32 %v1448, 0.0
        %v1457 = vmax.f32 %v1449, 0.0
        %v1458 = vmax.f32 %v1450, 0.0
        %v1459 = vmax.f32 %v1451, 0.0
        %v1460 = vmax.f32 %v1452, 0.0
        %v1461 = vmax.f32 %v1453, 0.0
        %v1462 = vmax.f32 %v1454, 0.0
        %v1463 = vmax.f32 %v1455, 0.0
        %1464 = vst [vmem:[%s413 + $0x1] sm:$0xff] %v1456
        %1465 = vst [vmem:[%s413 + $0x11] sm:$0xff] %v1457
        %1466 = vst [vmem:[%s413 + $0x21] sm:$0xff] %v1458
        %1467 = vst [vmem:[%s413 + $0x31] sm:$0xff] %v1459
        %1468 = vst [vmem:[%s413 + $0x41] sm:$0xff] %v1460
        %1469 = vst [vmem:[%s413 + $0x51] sm:$0xff] %v1461
        %1470 = vst [vmem:[%s413 + $0x61] sm:$0xff] %v1462
        %1471 = vst [vmem:[%s413 + $0x71] sm:$0xff] %v1463
        %v1472 = vld [vmem:[#allocation2] sm:$0xff]
        %v1473 = vld [vmem:[#allocation2 + $0x10] sm:$0xff]
        %v1474 = vld [vmem:[#allocation2 + $0x20] sm:$0xff]
        %v1475 = vld [vmem:[#allocation2 + $0x30] sm:$0xff]
        %v1476 = vld [vmem:[#allocation2 + $0x40] sm:$0xff]
        %v1477 = vld [vmem:[#allocation2 + $0x50] sm:$0xff]
        %v1478 = vld [vmem:[#allocation2 + $0x60] sm:$0xff]
        %v1479 = vld [vmem:[#allocation2 + $0x70] sm:$0xff]
        %v1480 = vpack.c.bf16 %v1473, %v1472
        %v1481 = vpack.c.bf16 %v1475, %v1474
        %v1482 = vpack.c.bf16 %v1477, %v1476
        %v1483 = vpack.c.bf16 %v1479, %v1478
        %v1484 = vld [vmem:[#allocation8] sm:$0xf]
        %v1485 = vld [vmem:[#allocation8 + $0x4] sm:$0xf]
        %v1486 = vld [vmem:[#allocation8 + $0x8] sm:$0xf]
        %v1487 = vld [vmem:[#allocation8 + $0xc] sm:$0xf]
        %v1488 = vld [vmem:[#allocation8 + $0x10] sm:$0xf]
        %v1489 = vld [vmem:[#allocation8 + $0x14] sm:$0xf]
        %v1490 = vld [vmem:[#allocation8 + $0x18] sm:$0xf]
        %v1491 = vld [vmem:[#allocation8 + $0x1c] sm:$0xf]
        %v1492 = vld [vmem:[#allocation8 + $0x20] sm:$0xf]
        %v1493 = vld [vmem:[#allocation8 + $0x24] sm:$0xf]
        %v1494 = vld [vmem:[#allocation8 + $0x28] sm:$0xf]
        %v1495 = vld [vmem:[#allocation8 + $0x2c] sm:$0xf]
        %v1496 = vld [vmem:[#allocation8 + $0x30] sm:$0xf]
        %v1497 = vld [vmem:[#allocation8 + $0x34] sm:$0xf]
        %v1498 = vld [vmem:[#allocation8 + $0x38] sm:$0xf]
        %v1499 = vld [vmem:[#allocation8 + $0x3c] sm:$0xf]
        %v1500 = vld [vmem:[#allocation2 + $0x1] sm:$0xff]
        %v1501 = vld [vmem:[#allocation2 + $0x11] sm:$0xff]
        %v1502 = vld [vmem:[#allocation2 + $0x21] sm:$0xff]
        %v1503 = vld [vmem:[#allocation2 + $0x31] sm:$0xff]
        %v1504 = vld [vmem:[#allocation2 + $0x41] sm:$0xff]
        %v1505 = vld [vmem:[#allocation2 + $0x51] sm:$0xff]
        %v1506 = vld [vmem:[#allocation2 + $0x61] sm:$0xff]
        %v1507 = vld [vmem:[#allocation2 + $0x71] sm:$0xff]
        %v1508 = vpack.c.bf16 %v1501, %v1500
        %v1509 = vpack.c.bf16 %v1503, %v1502
        %v1510 = vpack.c.bf16 %v1505, %v1504
        %v1511 = vpack.c.bf16 %v1507, %v1506
        %s1512 = scalar_lea.vmem [#allocation8], 64
        %v1513 = vld [vmem:[%s1512] sm:$0xf]
        %v1514 = vld [vmem:[%s1512 + $0x4] sm:$0xf]
        %v1515 = vld [vmem:[%s1512 + $0x8] sm:$0xf]
        %v1516 = vld [vmem:[%s1512 + $0xc] sm:$0xf]
        %v1517 = vld [vmem:[%s1512 + $0x10] sm:$0xf]
        %v1518 = vld [vmem:[%s1512 + $0x14] sm:$0xf]
        %v1519 = vld [vmem:[%s1512 + $0x18] sm:$0xf]
        %v1520 = vld [vmem:[%s1512 + $0x1c] sm:$0xf]
        %v1521 = vld [vmem:[%s1512 + $0x20] sm:$0xf]
        %v1522 = vld [vmem:[%s1512 + $0x24] sm:$0xf]
        %v1523 = vld [vmem:[%s1512 + $0x28] sm:$0xf]
        %v1524 = vld [vmem:[%s1512 + $0x2c] sm:$0xf]
        %v1525 = vld [vmem:[%s1512 + $0x30] sm:$0xf]
        %v1526 = vld [vmem:[%s1512 + $0x34] sm:$0xf]
        %v1527 = vld [vmem:[%s1512 + $0x38] sm:$0xf]
        %v1528 = vld [vmem:[%s1512 + $0x3c] sm:$0xf]
        %v1545 = vunpack.c.l.b16 %v1513
        %v1546 = vunpack.c.l.b16 %v1514
        %v1547 = vunpack.c.l.b16 %v1515
        %v1548 = vunpack.c.l.b16 %v1516
        %v1549 = vunpack.c.l.b16 %v1517
        %v1550 = vunpack.c.l.b16 %v1518
        %v1551 = vunpack.c.l.b16 %v1519
        %v1552 = vunpack.c.l.b16 %v1520
        %v1553 = vunpack.c.l.b16 %v1521
        %v1554 = vunpack.c.l.b16 %v1522
        %v1555 = vunpack.c.l.b16 %v1523
        %v1556 = vunpack.c.l.b16 %v1524
        %v1557 = vunpack.c.l.b16 %v1525
        %v1558 = vunpack.c.l.b16 %v1526
        %v1559 = vunpack.c.l.b16 %v1527
        %v1560 = vunpack.c.l.b16 %v1528
        %v1561 = vpack.c.b16 %v1546, %v1545
        %v1562 = vpack.c.b16 %v1548, %v1547
        %v1563 = vpack.c.b16 %v1550, %v1549
        %v1564 = vpack.c.b16 %v1552, %v1551
        %v1565 = vpack.c.b16 %v1554, %v1553
        %v1566 = vpack.c.b16 %v1556, %v1555
        %v1567 = vpack.c.b16 %v1558, %v1557
        %v1568 = vpack.c.b16 %v1560, %v1559
        %1577 = vmatpush.bf16.msra.mxu0 %v1568
        %1578 = vmatpush.bf16.msra.mxu0 %v1567
        %1579 = vmatpush.bf16.msra.mxu0 %v1566
        %1580 = vmatpush.bf16.msra.mxu0 %v1565
        %1581 = vmatpush.bf16.msra.mxu0 %v1564
        %1582 = vmatpush.bf16.msra.mxu0 %v1563
        %1583 = vmatpush.bf16.msra.mxu0 %v1562
        %1584 = vmatpush.bf16.msra.mxu0 %v1561
        %1585 = vmatmul.bf16.gmra.mxu0 %v1508
        %v1586 = vpop.f32.mrf.mxu0
        %v1587 = vadd.f32 0.0, %v1586
        %v1588 = vpop.f32.mrf.mxu0
        %v1589 = vadd.f32 0.0, %v1588
        %1590 = vmatmul.bf16.gmra.mxu0 %v1509
        %v1591 = vpop.f32.mrf.mxu0
        %v1592 = vadd.f32 0.0, %v1591
        %v1593 = vpop.f32.mrf.mxu0
        %v1594 = vadd.f32 0.0, %v1593
        %1595 = vmatmul.bf16.gmra.mxu0 %v1510
        %v1596 = vpop.f32.mrf.mxu0
        %v1597 = vadd.f32 0.0, %v1596
        %v1598 = vpop.f32.mrf.mxu0
        %v1599 = vadd.f32 0.0, %v1598
        %1600 = vmatmul.bf16.gmra.mxu0 %v1511
        %v1601 = vpop.f32.mrf.mxu0
        %v1602 = vadd.f32 0.0, %v1601
        %v1603 = vpop.f32.mrf.mxu0
        %v1604 = vadd.f32 0.0, %v1603
        %1605 = vdwg.mxu0
        %v1622 = vunpack.c.l.b16 %v1484
        %v1623 = vunpack.c.l.b16 %v1485
        %v1624 = vunpack.c.l.b16 %v1486
        %v1625 = vunpack.c.l.b16 %v1487
        %v1626 = vunpack.c.l.b16 %v1488
        %v1627 = vunpack.c.l.b16 %v1489
        %v1628 = vunpack.c.l.b16 %v1490
        %v1629 = vunpack.c.l.b16 %v1491
        %v1630 = vunpack.c.l.b16 %v1492
        %v1631 = vunpack.c.l.b16 %v1493
        %v1632 = vunpack.c.l.b16 %v1494
        %v1633 = vunpack.c.l.b16 %v1495
        %v1634 = vunpack.c.l.b16 %v1496
        %v1635 = vunpack.c.l.b16 %v1497
        %v1636 = vunpack.c.l.b16 %v1498
        %v1637 = vunpack.c.l.b16 %v1499
        %v1638 = vpack.c.b16 %v1623, %v1622
        %v1639 = vpack.c.b16 %v1625, %v1624
        %v1640 = vpack.c.b16 %v1627, %v1626
        %v1641 = vpack.c.b16 %v1629, %v1628
        %v1642 = vpack.c.b16 %v1631, %v1630
        %v1643 = vpack.c.b16 %v1633, %v1632
        %v1644 = vpack.c.b16 %v1635, %v1634
        %v1645 = vpack.c.b16 %v1637, %v1636
        %1654 = vmatpush.bf16.msra.mxu0 %v1645
        %1655 = vmatpush.bf16.msra.mxu0 %v1644
        %1656 = vmatpush.bf16.msra.mxu0 %v1643
        %1657 = vmatpush.bf16.msra.mxu0 %v1642
        %1658 = vmatpush.bf16.msra.mxu0 %v1641
        %1659 = vmatpush.bf16.msra.mxu0 %v1640
        %1660 = vmatpush.bf16.msra.mxu0 %v1639
        %1661 = vmatpush.bf16.msra.mxu0 %v1638
        %1662 = vmatmul.bf16.gmra.mxu0 %v1480
        %v1663 = vpop.f32.mrf.mxu0
        %v1664 = vadd.f32 %v1587, %v1663
        %v1665 = vpop.f32.mrf.mxu0
        %v1666 = vadd.f32 %v1589, %v1665
        %1667 = vmatmul.bf16.gmra.mxu0 %v1481
        %v1668 = vpop.f32.mrf.mxu0
        %v1669 = vadd.f32 %v1592, %v1668
        %v1670 = vpop.f32.mrf.mxu0
        %v1671 = vadd.f32 %v1594, %v1670
        %1672 = vmatmul.bf16.gmra.mxu0 %v1482
        %v1673 = vpop.f32.mrf.mxu0
        %v1674 = vadd.f32 %v1597, %v1673
        %v1675 = vpop.f32.mrf.mxu0
        %v1676 = vadd.f32 %v1599, %v1675
        %1677 = vmatmul.bf16.gmra.mxu0 %v1483
        %v1678 = vpop.f32.mrf.mxu0
        %v1679 = vadd.f32 %v1602, %v1678
        %v1680 = vpop.f32.mrf.mxu0
        %v1681 = vadd.f32 %v1604, %v1680
        %1682 = vdwg.mxu0
        %v1683 = vld [vmem:[#allocation2 + $0x2] sm:$0xff]
        %v1684 = vld [vmem:[#allocation2 + $0x12] sm:$0xff]
        %v1685 = vld [vmem:[#allocation2 + $0x22] sm:$0xff]
        %v1686 = vld [vmem:[#allocation2 + $0x32] sm:$0xff]
        %v1687 = vld [vmem:[#allocation2 + $0x42] sm:$0xff]
        %v1688 = vld [vmem:[#allocation2 + $0x52] sm:$0xff]
        %v1689 = vld [vmem:[#allocation2 + $0x62] sm:$0xff]
        %v1690 = vld [vmem:[#allocation2 + $0x72] sm:$0xff]
        %v1691 = vpack.c.bf16 %v1684, %v1683
        %v1692 = vpack.c.bf16 %v1686, %v1685
        %v1693 = vpack.c.bf16 %v1688, %v1687
        %v1694 = vpack.c.bf16 %v1690, %v1689
        %s1695 = scalar_lea.vmem [#allocation8], 128
        %v1696 = vld [vmem:[%s1695] sm:$0xf]
        %v1697 = vld [vmem:[%s1695 + $0x4] sm:$0xf]
        %v1698 = vld [vmem:[%s1695 + $0x8] sm:$0xf]
        %v1699 = vld [vmem:[%s1695 + $0xc] sm:$0xf]
        %v1700 = vld [vmem:[%s1695 + $0x10] sm:$0xf]
        %v1701 = vld [vmem:[%s1695 + $0x14] sm:$0xf]
        %v1702 = vld [vmem:[%s1695 + $0x18] sm:$0xf]
        %v1703 = vld [vmem:[%s1695 + $0x1c] sm:$0xf]
        %v1704 = vld [vmem:[%s1695 + $0x20] sm:$0xf]
        %v1705 = vld [vmem:[%s1695 + $0x24] sm:$0xf]
        %v1706 = vld [vmem:[%s1695 + $0x28] sm:$0xf]
        %v1707 = vld [vmem:[%s1695 + $0x2c] sm:$0xf]
        %v1708 = vld [vmem:[%s1695 + $0x30] sm:$0xf]
        %v1709 = vld [vmem:[%s1695 + $0x34] sm:$0xf]
        %v1710 = vld [vmem:[%s1695 + $0x38] sm:$0xf]
        %v1711 = vld [vmem:[%s1695 + $0x3c] sm:$0xf]
        %v1728 = vunpack.c.l.b16 %v1696
        %v1729 = vunpack.c.l.b16 %v1697
        %v1730 = vunpack.c.l.b16 %v1698
        %v1731 = vunpack.c.l.b16 %v1699
        %v1732 = vunpack.c.l.b16 %v1700
        %v1733 = vunpack.c.l.b16 %v1701
        %v1734 = vunpack.c.l.b16 %v1702
        %v1735 = vunpack.c.l.b16 %v1703
        %v1736 = vunpack.c.l.b16 %v1704
        %v1737 = vunpack.c.l.b16 %v1705
        %v1738 = vunpack.c.l.b16 %v1706
        %v1739 = vunpack.c.l.b16 %v1707
        %v1740 = vunpack.c.l.b16 %v1708
        %v1741 = vunpack.c.l.b16 %v1709
        %v1742 = vunpack.c.l.b16 %v1710
        %v1743 = vunpack.c.l.b16 %v1711
        %v1744 = vpack.c.b16 %v1729, %v1728
        %v1745 = vpack.c.b16 %v1731, %v1730
        %v1746 = vpack.c.b16 %v1733, %v1732
        %v1747 = vpack.c.b16 %v1735, %v1734
        %v1748 = vpack.c.b16 %v1737, %v1736
        %v1749 = vpack.c.b16 %v1739, %v1738
        %v1750 = vpack.c.b16 %v1741, %v1740
        %v1751 = vpack.c.b16 %v1743, %v1742
        %1760 = vmatpush.bf16.msra.mxu0 %v1751
        %1761 = vmatpush.bf16.msra.mxu0 %v1750
        %1762 = vmatpush.bf16.msra.mxu0 %v1749
        %1763 = vmatpush.bf16.msra.mxu0 %v1748
        %1764 = vmatpush.bf16.msra.mxu0 %v1747
        %1765 = vmatpush.bf16.msra.mxu0 %v1746
        %1766 = vmatpush.bf16.msra.mxu0 %v1745
        %1767 = vmatpush.bf16.msra.mxu0 %v1744
        %1768 = vmatmul.bf16.gmra.mxu0 %v1691
        %v1769 = vpop.f32.mrf.mxu0
        %v1770 = vadd.f32 0.0, %v1769
        %v1771 = vpop.f32.mrf.mxu0
        %v1772 = vadd.f32 0.0, %v1771
        %1773 = vmatmul.bf16.gmra.mxu0 %v1692
        %v1774 = vpop.f32.mrf.mxu0
        %v1775 = vadd.f32 0.0, %v1774
        %v1776 = vpop.f32.mrf.mxu0
        %v1777 = vadd.f32 0.0, %v1776
        %1778 = vmatmul.bf16.gmra.mxu0 %v1693
        %v1779 = vpop.f32.mrf.mxu0
        %v1780 = vadd.f32 0.0, %v1779
        %v1781 = vpop.f32.mrf.mxu0
        %v1782 = vadd.f32 0.0, %v1781
        %1783 = vmatmul.bf16.gmra.mxu0 %v1694
        %v1784 = vpop.f32.mrf.mxu0
        %v1785 = vadd.f32 0.0, %v1784
        %v1786 = vpop.f32.mrf.mxu0
        %v1787 = vadd.f32 0.0, %v1786
        %1788 = vdwg.mxu0
        %v1789 = vadd.f32 %v1664, %v1770
        %v1790 = vadd.f32 %v1666, %v1772
        %v1791 = vadd.f32 %v1669, %v1775
        %v1792 = vadd.f32 %v1671, %v1777
        %v1793 = vadd.f32 %v1674, %v1780
        %v1794 = vadd.f32 %v1676, %v1782
        %v1795 = vadd.f32 %v1679, %v1785
        %v1796 = vadd.f32 %v1681, %v1787
        %v1797 = vld [vmem:[%s413] sm:$0xff]
        %v1798 = vld [vmem:[%s413 + $0x10] sm:$0xff]
        %v1799 = vld [vmem:[%s413 + $0x20] sm:$0xff]
        %v1800 = vld [vmem:[%s413 + $0x30] sm:$0xff]
        %v1801 = vld [vmem:[%s413 + $0x40] sm:$0xff]
        %v1802 = vld [vmem:[%s413 + $0x50] sm:$0xff]
        %v1803 = vld [vmem:[%s413 + $0x60] sm:$0xff]
        %v1804 = vld [vmem:[%s413 + $0x70] sm:$0xff]
        %v1805 = vpack.c.bf16 %v1798, %v1797
        %v1806 = vpack.c.bf16 %v1800, %v1799
        %v1807 = vpack.c.bf16 %v1802, %v1801
        %v1808 = vpack.c.bf16 %v1804, %v1803
        %s1809 = scalar_lea.vmem [#allocation8], 192
        %v1810 = vld [vmem:[%s1809] sm:$0xf]
        %v1811 = vld [vmem:[%s1809 + $0x4] sm:$0xf]
        %v1812 = vld [vmem:[%s1809 + $0x8] sm:$0xf]
        %v1813 = vld [vmem:[%s1809 + $0xc] sm:$0xf]
        %v1814 = vld [vmem:[%s1809 + $0x10] sm:$0xf]
        %v1815 = vld [vmem:[%s1809 + $0x14] sm:$0xf]
        %v1816 = vld [vmem:[%s1809 + $0x18] sm:$0xf]
        %v1817 = vld [vmem:[%s1809 + $0x1c] sm:$0xf]
        %v1818 = vld [vmem:[%s1809 + $0x20] sm:$0xf]
        %v1819 = vld [vmem:[%s1809 + $0x24] sm:$0xf]
        %v1820 = vld [vmem:[%s1809 + $0x28] sm:$0xf]
        %v1821 = vld [vmem:[%s1809 + $0x2c] sm:$0xf]
        %v1822 = vld [vmem:[%s1809 + $0x30] sm:$0xf]
        %v1823 = vld [vmem:[%s1809 + $0x34] sm:$0xf]
        %v1824 = vld [vmem:[%s1809 + $0x38] sm:$0xf]
        %v1825 = vld [vmem:[%s1809 + $0x3c] sm:$0xf]
        %v1842 = vunpack.c.l.b16 %v1810
        %v1843 = vunpack.c.l.b16 %v1811
        %v1844 = vunpack.c.l.b16 %v1812
        %v1845 = vunpack.c.l.b16 %v1813
        %v1846 = vunpack.c.l.b16 %v1814
        %v1847 = vunpack.c.l.b16 %v1815
        %v1848 = vunpack.c.l.b16 %v1816
        %v1849 = vunpack.c.l.b16 %v1817
        %v1850 = vunpack.c.l.b16 %v1818
        %v1851 = vunpack.c.l.b16 %v1819
        %v1852 = vunpack.c.l.b16 %v1820
        %v1853 = vunpack.c.l.b16 %v1821
        %v1854 = vunpack.c.l.b16 %v1822
        %v1855 = vunpack.c.l.b16 %v1823
        %v1856 = vunpack.c.l.b16 %v1824
        %v1857 = vunpack.c.l.b16 %v1825
        %v1858 = vpack.c.b16 %v1843, %v1842
        %v1859 = vpack.c.b16 %v1845, %v1844
        %v1860 = vpack.c.b16 %v1847, %v1846
        %v1861 = vpack.c.b16 %v1849, %v1848
        %v1862 = vpack.c.b16 %v1851, %v1850
        %v1863 = vpack.c.b16 %v1853, %v1852
        %v1864 = vpack.c.b16 %v1855, %v1854
        %v1865 = vpack.c.b16 %v1857, %v1856
        %1874 = vmatpush.bf16.msra.mxu0 %v1865
        %1875 = vmatpush.bf16.msra.mxu0 %v1864
        %1876 = vmatpush.bf16.msra.mxu0 %v1863
        %1877 = vmatpush.bf16.msra.mxu0 %v1862
        %1878 = vmatpush.bf16.msra.mxu0 %v1861
        %1879 = vmatpush.bf16.msra.mxu0 %v1860
        %1880 = vmatpush.bf16.msra.mxu0 %v1859
        %1881 = vmatpush.bf16.msra.mxu0 %v1858
        %1882 = vmatmul.bf16.gmra.mxu0 %v1805
        %v1883 = vpop.f32.mrf.mxu0
        %v1884 = vadd.f32 0.0, %v1883
        %v1885 = vpop.f32.mrf.mxu0
        %v1886 = vadd.f32 0.0, %v1885
        %1887 = vmatmul.bf16.gmra.mxu0 %v1806
        %v1888 = vpop.f32.mrf.mxu0
        %v1889 = vadd.f32 0.0, %v1888
        %v1890 = vpop.f32.mrf.mxu0
        %v1891 = vadd.f32 0.0, %v1890
        %1892 = vmatmul.bf16.gmra.mxu0 %v1807
        %v1893 = vpop.f32.mrf.mxu0
        %v1894 = vadd.f32 0.0, %v1893
        %v1895 = vpop.f32.mrf.mxu0
        %v1896 = vadd.f32 0.0, %v1895
        %1897 = vmatmul.bf16.gmra.mxu0 %v1808
        %v1898 = vpop.f32.mrf.mxu0
        %v1899 = vadd.f32 0.0, %v1898
        %v1900 = vpop.f32.mrf.mxu0
        %v1901 = vadd.f32 0.0, %v1900
        %1902 = vdwg.mxu0
        %v1903 = vadd.f32 %v1789, %v1884
        %v1904 = vadd.f32 %v1790, %v1886
        %v1905 = vadd.f32 %v1791, %v1889
        %v1906 = vadd.f32 %v1792, %v1891
        %v1907 = vadd.f32 %v1793, %v1894
        %v1908 = vadd.f32 %v1794, %v1896
        %v1909 = vadd.f32 %v1795, %v1899
        %v1910 = vadd.f32 %v1796, %v1901
        %v1911 = vld [vmem:[%s413 + $0x1] sm:$0xff]
        %v1912 = vld [vmem:[%s413 + $0x11] sm:$0xff]
        %v1913 = vld [vmem:[%s413 + $0x21] sm:$0xff]
        %v1914 = vld [vmem:[%s413 + $0x31] sm:$0xff]
        %v1915 = vld [vmem:[%s413 + $0x41] sm:$0xff]
        %v1916 = vld [vmem:[%s413 + $0x51] sm:$0xff]
        %v1917 = vld [vmem:[%s413 + $0x61] sm:$0xff]
        %v1918 = vld [vmem:[%s413 + $0x71] sm:$0xff]
        %v1919 = vpack.c.bf16 %v1912, %v1911
        %v1920 = vpack.c.bf16 %v1914, %v1913
        %v1921 = vpack.c.bf16 %v1916, %v1915
        %v1922 = vpack.c.bf16 %v1918, %v1917
        %s1923 = scalar_lea.vmem [#allocation8], 256
        %v1924 = vld [vmem:[%s1923] sm:$0xf]
        %v1925 = vld [vmem:[%s1923 + $0x4] sm:$0xf]
        %v1926 = vld [vmem:[%s1923 + $0x8] sm:$0xf]
        %v1927 = vld [vmem:[%s1923 + $0xc] sm:$0xf]
        %v1928 = vld [vmem:[%s1923 + $0x10] sm:$0xf]
        %v1929 = vld [vmem:[%s1923 + $0x14] sm:$0xf]
        %v1930 = vld [vmem:[%s1923 + $0x18] sm:$0xf]
        %v1931 = vld [vmem:[%s1923 + $0x1c] sm:$0xf]
        %v1932 = vld [vmem:[%s1923 + $0x20] sm:$0xf]
        %v1933 = vld [vmem:[%s1923 + $0x24] sm:$0xf]
        %v1934 = vld [vmem:[%s1923 + $0x28] sm:$0xf]
        %v1935 = vld [vmem:[%s1923 + $0x2c] sm:$0xf]
        %v1936 = vld [vmem:[%s1923 + $0x30] sm:$0xf]
        %v1937 = vld [vmem:[%s1923 + $0x34] sm:$0xf]
        %v1938 = vld [vmem:[%s1923 + $0x38] sm:$0xf]
        %v1939 = vld [vmem:[%s1923 + $0x3c] sm:$0xf]
        %v1956 = vunpack.c.l.b16 %v1924
        %v1957 = vunpack.c.l.b16 %v1925
        %v1958 = vunpack.c.l.b16 %v1926
        %v1959 = vunpack.c.l.b16 %v1927
        %v1960 = vunpack.c.l.b16 %v1928
        %v1961 = vunpack.c.l.b16 %v1929
        %v1962 = vunpack.c.l.b16 %v1930
        %v1963 = vunpack.c.l.b16 %v1931
        %v1964 = vunpack.c.l.b16 %v1932
        %v1965 = vunpack.c.l.b16 %v1933
        %v1966 = vunpack.c.l.b16 %v1934
        %v1967 = vunpack.c.l.b16 %v1935
        %v1968 = vunpack.c.l.b16 %v1936
        %v1969 = vunpack.c.l.b16 %v1937
        %v1970 = vunpack.c.l.b16 %v1938
        %v1971 = vunpack.c.l.b16 %v1939
        %v1972 = vpack.c.b16 %v1957, %v1956
        %v1973 = vpack.c.b16 %v1959, %v1958
        %v1974 = vpack.c.b16 %v1961, %v1960
        %v1975 = vpack.c.b16 %v1963, %v1962
        %v1976 = vpack.c.b16 %v1965, %v1964
        %v1977 = vpack.c.b16 %v1967, %v1966
        %v1978 = vpack.c.b16 %v1969, %v1968
        %v1979 = vpack.c.b16 %v1971, %v1970
        %1988 = vmatpush.bf16.msra.mxu0 %v1979
        %1989 = vmatpush.bf16.msra.mxu0 %v1978
        %1990 = vmatpush.bf16.msra.mxu0 %v1977
        %1991 = vmatpush.bf16.msra.mxu0 %v1976
        %1992 = vmatpush.bf16.msra.mxu0 %v1975
        %1993 = vmatpush.bf16.msra.mxu0 %v1974
        %1994 = vmatpush.bf16.msra.mxu0 %v1973
        %1995 = vmatpush.bf16.msra.mxu0 %v1972
        %1996 = vmatmul.bf16.gmra.mxu0 %v1919
        %v1997 = vpop.f32.mrf.mxu0
        %v1998 = vadd.f32 0.0, %v1997
        %v1999 = vpop.f32.mrf.mxu0
        %v2000 = vadd.f32 0.0, %v1999
        %2001 = vmatmul.bf16.gmra.mxu0 %v1920
        %v2002 = vpop.f32.mrf.mxu0
        %v2003 = vadd.f32 0.0, %v2002
        %v2004 = vpop.f32.mrf.mxu0
        %v2005 = vadd.f32 0.0, %v2004
        %2006 = vmatmul.bf16.gmra.mxu0 %v1921
        %v2007 = vpop.f32.mrf.mxu0
        %v2008 = vadd.f32 0.0, %v2007
        %v2009 = vpop.f32.mrf.mxu0
        %v2010 = vadd.f32 0.0, %v2009
        %2011 = vmatmul.bf16.gmra.mxu0 %v1922
        %v2012 = vpop.f32.mrf.mxu0
        %v2013 = vadd.f32 0.0, %v2012
        %v2014 = vpop.f32.mrf.mxu0
        %v2015 = vadd.f32 0.0, %v2014
        %2016 = vdwg.mxu0
        %v2017 = vadd.f32 %v1903, %v1998
        %v2018 = vadd.f32 %v1904, %v2000
        %v2019 = vadd.f32 %v1905, %v2003
        %v2020 = vadd.f32 %v1906, %v2005
        %v2021 = vadd.f32 %v1907, %v2008
        %v2022 = vadd.f32 %v1908, %v2010
        %v2023 = vadd.f32 %v1909, %v2013
        %v2024 = vadd.f32 %v1910, %v2015
        %v2025 = vld [vmem:[%s413 + $0x2] sm:$0xff]
        %v2026 = vld [vmem:[%s413 + $0x12] sm:$0xff]
        %v2027 = vld [vmem:[%s413 + $0x22] sm:$0xff]
        %v2028 = vld [vmem:[%s413 + $0x32] sm:$0xff]
        %v2029 = vld [vmem:[%s413 + $0x42] sm:$0xff]
        %v2030 = vld [vmem:[%s413 + $0x52] sm:$0xff]
        %v2031 = vld [vmem:[%s413 + $0x62] sm:$0xff]
        %v2032 = vld [vmem:[%s413 + $0x72] sm:$0xff]
        %v2033 = vpack.c.bf16 %v2026, %v2025
        %v2034 = vpack.c.bf16 %v2028, %v2027
        %v2035 = vpack.c.bf16 %v2030, %v2029
        %v2036 = vpack.c.bf16 %v2032, %v2031
        %s2037 = scalar_lea.vmem [#allocation8], 320
        %v2038 = vld [vmem:[%s2037] sm:$0xf]
        %v2039 = vld [vmem:[%s2037 + $0x4] sm:$0xf]
        %v2040 = vld [vmem:[%s2037 + $0x8] sm:$0xf]
        %v2041 = vld [vmem:[%s2037 + $0xc] sm:$0xf]
        %v2042 = vld [vmem:[%s2037 + $0x10] sm:$0xf]
        %v2043 = vld [vmem:[%s2037 + $0x14] sm:$0xf]
        %v2044 = vld [vmem:[%s2037 + $0x18] sm:$0xf]
        %v2045 = vld [vmem:[%s2037 + $0x1c] sm:$0xf]
        %v2046 = vld [vmem:[%s2037 + $0x20] sm:$0xf]
        %v2047 = vld [vmem:[%s2037 + $0x24] sm:$0xf]
        %v2048 = vld [vmem:[%s2037 + $0x28] sm:$0xf]
        %v2049 = vld [vmem:[%s2037 + $0x2c] sm:$0xf]
        %v2050 = vld [vmem:[%s2037 + $0x30] sm:$0xf]
        %v2051 = vld [vmem:[%s2037 + $0x34] sm:$0xf]
        %v2052 = vld [vmem:[%s2037 + $0x38] sm:$0xf]
        %v2053 = vld [vmem:[%s2037 + $0x3c] sm:$0xf]
        %v2070 = vunpack.c.l.b16 %v2038
        %v2071 = vunpack.c.l.b16 %v2039
        %v2072 = vunpack.c.l.b16 %v2040
        %v2073 = vunpack.c.l.b16 %v2041
        %v2074 = vunpack.c.l.b16 %v2042
        %v2075 = vunpack.c.l.b16 %v2043
        %v2076 = vunpack.c.l.b16 %v2044
        %v2077 = vunpack.c.l.b16 %v2045
        %v2078 = vunpack.c.l.b16 %v2046
        %v2079 = vunpack.c.l.b16 %v2047
        %v2080 = vunpack.c.l.b16 %v2048
        %v2081 = vunpack.c.l.b16 %v2049
        %v2082 = vunpack.c.l.b16 %v2050
        %v2083 = vunpack.c.l.b16 %v2051
        %v2084 = vunpack.c.l.b16 %v2052
        %v2085 = vunpack.c.l.b16 %v2053
        %v2086 = vpack.c.b16 %v2071, %v2070
        %v2087 = vpack.c.b16 %v2073, %v2072
        %v2088 = vpack.c.b16 %v2075, %v2074
        %v2089 = vpack.c.b16 %v2077, %v2076
        %v2090 = vpack.c.b16 %v2079, %v2078
        %v2091 = vpack.c.b16 %v2081, %v2080
        %v2092 = vpack.c.b16 %v2083, %v2082
        %v2093 = vpack.c.b16 %v2085, %v2084
        %2102 = vmatpush.bf16.msra.mxu0 %v2093
        %2103 = vmatpush.bf16.msra.mxu0 %v2092
        %2104 = vmatpush.bf16.msra.mxu0 %v2091
        %2105 = vmatpush.bf16.msra.mxu0 %v2090
        %2106 = vmatpush.bf16.msra.mxu0 %v2089
        %2107 = vmatpush.bf16.msra.mxu0 %v2088
        %2108 = vmatpush.bf16.msra.mxu0 %v2087
        %2109 = vmatpush.bf16.msra.mxu0 %v2086
        %2110 = vmatmul.bf16.gmra.mxu0 %v2033
        %v2111 = vpop.f32.mrf.mxu0
        %v2112 = vadd.f32 0.0, %v2111
        %v2113 = vpop.f32.mrf.mxu0
        %v2114 = vadd.f32 0.0, %v2113
        %2115 = vmatmul.bf16.gmra.mxu0 %v2034
        %v2116 = vpop.f32.mrf.mxu0
        %v2117 = vadd.f32 0.0, %v2116
        %v2118 = vpop.f32.mrf.mxu0
        %v2119 = vadd.f32 0.0, %v2118
        %2120 = vmatmul.bf16.gmra.mxu0 %v2035
        %v2121 = vpop.f32.mrf.mxu0
        %v2122 = vadd.f32 0.0, %v2121
        %v2123 = vpop.f32.mrf.mxu0
        %v2124 = vadd.f32 0.0, %v2123
        %2125 = vmatmul.bf16.gmra.mxu0 %v2036
        %v2126 = vpop.f32.mrf.mxu0
        %v2127 = vadd.f32 0.0, %v2126
        %v2128 = vpop.f32.mrf.mxu0
        %v2129 = vadd.f32 0.0, %v2128
        %2130 = vdwg.mxu0
        %v2131 = vadd.f32 %v2017, %v2112
        %v2132 = vadd.f32 %v2018, %v2114
        %v2133 = vadd.f32 %v2019, %v2117
        %v2134 = vadd.f32 %v2020, %v2119
        %v2135 = vadd.f32 %v2021, %v2122
        %v2136 = vadd.f32 %v2022, %v2124
        %v2137 = vadd.f32 %v2023, %v2127
        %v2138 = vadd.f32 %v2024, %v2129
        %v2139 = vld [vmem:[%s1089] sm:$0xff]
        %v2140 = vld [vmem:[%s1089 + $0x10] sm:$0xff]
        %v2141 = vld [vmem:[%s1089 + $0x20] sm:$0xff]
        %v2142 = vld [vmem:[%s1089 + $0x30] sm:$0xff]
        %v2143 = vld [vmem:[%s1089 + $0x40] sm:$0xff]
        %v2144 = vld [vmem:[%s1089 + $0x50] sm:$0xff]
        %v2145 = vld [vmem:[%s1089 + $0x60] sm:$0xff]
        %v2146 = vld [vmem:[%s1089 + $0x70] sm:$0xff]
        %v2147 = vpack.c.bf16 %v2140, %v2139
        %v2148 = vpack.c.bf16 %v2142, %v2141
        %v2149 = vpack.c.bf16 %v2144, %v2143
        %v2150 = vpack.c.bf16 %v2146, %v2145
        %s2151 = scalar_lea.vmem [#allocation8], 384
        %v2152 = vld [vmem:[%s2151] sm:$0xf]
        %v2153 = vld [vmem:[%s2151 + $0x4] sm:$0xf]
        %v2154 = vld [vmem:[%s2151 + $0x8] sm:$0xf]
        %v2155 = vld [vmem:[%s2151 + $0xc] sm:$0xf]
        %v2156 = vld [vmem:[%s2151 + $0x10] sm:$0xf]
        %v2157 = vld [vmem:[%s2151 + $0x14] sm:$0xf]
        %v2158 = vld [vmem:[%s2151 + $0x18] sm:$0xf]
        %v2159 = vld [vmem:[%s2151 + $0x1c] sm:$0xf]
        %v2160 = vld [vmem:[%s2151 + $0x20] sm:$0xf]
        %v2161 = vld [vmem:[%s2151 + $0x24] sm:$0xf]
        %v2162 = vld [vmem:[%s2151 + $0x28] sm:$0xf]
        %v2163 = vld [vmem:[%s2151 + $0x2c] sm:$0xf]
        %v2164 = vld [vmem:[%s2151 + $0x30] sm:$0xf]
        %v2165 = vld [vmem:[%s2151 + $0x34] sm:$0xf]
        %v2166 = vld [vmem:[%s2151 + $0x38] sm:$0xf]
        %v2167 = vld [vmem:[%s2151 + $0x3c] sm:$0xf]
        %v2184 = vunpack.c.l.b16 %v2152
        %v2185 = vunpack.c.l.b16 %v2153
        %v2186 = vunpack.c.l.b16 %v2154
        %v2187 = vunpack.c.l.b16 %v2155
        %v2188 = vunpack.c.l.b16 %v2156
        %v2189 = vunpack.c.l.b16 %v2157
        %v2190 = vunpack.c.l.b16 %v2158
        %v2191 = vunpack.c.l.b16 %v2159
        %v2192 = vunpack.c.l.b16 %v2160
        %v2193 = vunpack.c.l.b16 %v2161
        %v2194 = vunpack.c.l.b16 %v2162
        %v2195 = vunpack.c.l.b16 %v2163
        %v2196 = vunpack.c.l.b16 %v2164
        %v2197 = vunpack.c.l.b16 %v2165
        %v2198 = vunpack.c.l.b16 %v2166
        %v2199 = vunpack.c.l.b16 %v2167
        %v2200 = vpack.c.b16 %v2185, %v2184
        %v2201 = vpack.c.b16 %v2187, %v2186
        %v2202 = vpack.c.b16 %v2189, %v2188
        %v2203 = vpack.c.b16 %v2191, %v2190
        %v2204 = vpack.c.b16 %v2193, %v2192
        %v2205 = vpack.c.b16 %v2195, %v2194
        %v2206 = vpack.c.b16 %v2197, %v2196
        %v2207 = vpack.c.b16 %v2199, %v2198
        %2216 = vmatpush.bf16.msra.mxu0 %v2207
        %2217 = vmatpush.bf16.msra.mxu0 %v2206
        %2218 = vmatpush.bf16.msra.mxu0 %v2205
        %2219 = vmatpush.bf16.msra.mxu0 %v2204
        %2220 = vmatpush.bf16.msra.mxu0 %v2203
        %2221 = vmatpush.bf16.msra.mxu0 %v2202
        %2222 = vmatpush.bf16.msra.mxu0 %v2201
        %2223 = vmatpush.bf16.msra.mxu0 %v2200
        %2224 = vmatmul.bf16.gmra.mxu0 %v2147
        %v2225 = vpop.f32.mrf.mxu0
        %v2226 = vadd.f32 0.0, %v2225
        %v2227 = vpop.f32.mrf.mxu0
        %v2228 = vadd.f32 0.0, %v2227
        %2229 = vmatmul.bf16.gmra.mxu0 %v2148
        %v2230 = vpop.f32.mrf.mxu0
        %v2231 = vadd.f32 0.0, %v2230
        %v2232 = vpop.f32.mrf.mxu0
        %v2233 = vadd.f32 0.0, %v2232
        %2234 = vmatmul.bf16.gmra.mxu0 %v2149
        %v2235 = vpop.f32.mrf.mxu0
        %v2236 = vadd.f32 0.0, %v2235
        %v2237 = vpop.f32.mrf.mxu0
        %v2238 = vadd.f32 0.0, %v2237
        %2239 = vmatmul.bf16.gmra.mxu0 %v2150
        %v2240 = vpop.f32.mrf.mxu0
        %v2241 = vadd.f32 0.0, %v2240
        %v2242 = vpop.f32.mrf.mxu0
        %v2243 = vadd.f32 0.0, %v2242
        %2244 = vdwg.mxu0
        %v2245 = vadd.f32 %v2131, %v2226
        %v2246 = vadd.f32 %v2132, %v2228
        %v2247 = vadd.f32 %v2133, %v2231
        %v2248 = vadd.f32 %v2134, %v2233
        %v2249 = vadd.f32 %v2135, %v2236
        %v2250 = vadd.f32 %v2136, %v2238
        %v2251 = vadd.f32 %v2137, %v2241
        %v2252 = vadd.f32 %v2138, %v2243
        %v2253 = vld [vmem:[%s1089 + $0x1] sm:$0xff]
        %v2254 = vld [vmem:[%s1089 + $0x11] sm:$0xff]
        %v2255 = vld [vmem:[%s1089 + $0x21] sm:$0xff]
        %v2256 = vld [vmem:[%s1089 + $0x31] sm:$0xff]
        %v2257 = vld [vmem:[%s1089 + $0x41] sm:$0xff]
        %v2258 = vld [vmem:[%s1089 + $0x51] sm:$0xff]
        %v2259 = vld [vmem:[%s1089 + $0x61] sm:$0xff]
        %v2260 = vld [vmem:[%s1089 + $0x71] sm:$0xff]
        %v2261 = vpack.c.bf16 %v2254, %v2253
        %v2262 = vpack.c.bf16 %v2256, %v2255
        %v2263 = vpack.c.bf16 %v2258, %v2257
        %v2264 = vpack.c.bf16 %v2260, %v2259
        %s2265 = scalar_lea.vmem [#allocation8], 448
        %v2266 = vld [vmem:[%s2265] sm:$0xf]
        %v2267 = vld [vmem:[%s2265 + $0x4] sm:$0xf]
        %v2268 = vld [vmem:[%s2265 + $0x8] sm:$0xf]
        %v2269 = vld [vmem:[%s2265 + $0xc] sm:$0xf]
        %v2270 = vld [vmem:[%s2265 + $0x10] sm:$0xf]
        %v2271 = vld [vmem:[%s2265 + $0x14] sm:$0xf]
        %v2272 = vld [vmem:[%s2265 + $0x18] sm:$0xf]
        %v2273 = vld [vmem:[%s2265 + $0x1c] sm:$0xf]
        %v2274 = vld [vmem:[%s2265 + $0x20] sm:$0xf]
        %v2275 = vld [vmem:[%s2265 + $0x24] sm:$0xf]
        %v2276 = vld [vmem:[%s2265 + $0x28] sm:$0xf]
        %v2277 = vld [vmem:[%s2265 + $0x2c] sm:$0xf]
        %v2278 = vld [vmem:[%s2265 + $0x30] sm:$0xf]
        %v2279 = vld [vmem:[%s2265 + $0x34] sm:$0xf]
        %v2280 = vld [vmem:[%s2265 + $0x38] sm:$0xf]
        %v2281 = vld [vmem:[%s2265 + $0x3c] sm:$0xf]
        %v2298 = vunpack.c.l.b16 %v2266
        %v2299 = vunpack.c.l.b16 %v2267
        %v2300 = vunpack.c.l.b16 %v2268
        %v2301 = vunpack.c.l.b16 %v2269
        %v2302 = vunpack.c.l.b16 %v2270
        %v2303 = vunpack.c.l.b16 %v2271
        %v2304 = vunpack.c.l.b16 %v2272
        %v2305 = vunpack.c.l.b16 %v2273
        %v2306 = vunpack.c.l.b16 %v2274
        %v2307 = vunpack.c.l.b16 %v2275
        %v2308 = vunpack.c.l.b16 %v2276
        %v2309 = vunpack.c.l.b16 %v2277
        %v2310 = vunpack.c.l.b16 %v2278
        %v2311 = vunpack.c.l.b16 %v2279
        %v2312 = vunpack.c.l.b16 %v2280
        %v2313 = vunpack.c.l.b16 %v2281
        %v2314 = vpack.c.b16 %v2299, %v2298
        %v2315 = vpack.c.b16 %v2301, %v2300
        %v2316 = vpack.c.b16 %v2303, %v2302
        %v2317 = vpack.c.b16 %v2305, %v2304
        %v2318 = vpack.c.b16 %v2307, %v2306
        %v2319 = vpack.c.b16 %v2309, %v2308
        %v2320 = vpack.c.b16 %v2311, %v2310
        %v2321 = vpack.c.b16 %v2313, %v2312
        %2330 = vmatpush.bf16.msra.mxu0 %v2321
        %2331 = vmatpush.bf16.msra.mxu0 %v2320
        %2332 = vmatpush.bf16.msra.mxu0 %v2319
        %2333 = vmatpush.bf16.msra.mxu0 %v2318
        %2334 = vmatpush.bf16.msra.mxu0 %v2317
        %2335 = vmatpush.bf16.msra.mxu0 %v2316
        %2336 = vmatpush.bf16.msra.mxu0 %v2315
        %2337 = vmatpush.bf16.msra.mxu0 %v2314
        %2338 = vmatmul.bf16.gmra.mxu0 %v2261
        %v2339 = vpop.f32.mrf.mxu0
        %v2340 = vadd.f32 0.0, %v2339
        %v2341 = vpop.f32.mrf.mxu0
        %v2342 = vadd.f32 0.0, %v2341
        %2343 = vmatmul.bf16.gmra.mxu0 %v2262
        %v2344 = vpop.f32.mrf.mxu0
        %v2345 = vadd.f32 0.0, %v2344
        %v2346 = vpop.f32.mrf.mxu0
        %v2347 = vadd.f32 0.0, %v2346
        %2348 = vmatmul.bf16.gmra.mxu0 %v2263
        %v2349 = vpop.f32.mrf.mxu0
        %v2350 = vadd.f32 0.0, %v2349
        %v2351 = vpop.f32.mrf.mxu0
        %v2352 = vadd.f32 0.0, %v2351
        %2353 = vmatmul.bf16.gmra.mxu0 %v2264
        %v2354 = vpop.f32.mrf.mxu0
        %v2355 = vadd.f32 0.0, %v2354
        %v2356 = vpop.f32.mrf.mxu0
        %v2357 = vadd.f32 0.0, %v2356
        %2358 = vdwg.mxu0
        %v2359 = vadd.f32 %v2245, %v2340
        %v2360 = vadd.f32 %v2246, %v2342
        %v2361 = vadd.f32 %v2247, %v2345
        %v2362 = vadd.f32 %v2248, %v2347
        %v2363 = vadd.f32 %v2249, %v2350
        %v2364 = vadd.f32 %v2250, %v2352
        %v2365 = vadd.f32 %v2251, %v2355
        %v2366 = vadd.f32 %v2252, %v2357
        %v2367 = vld [vmem:[%s1089 + $0x2] sm:$0xff]
        %v2368 = vld [vmem:[%s1089 + $0x12] sm:$0xff]
        %v2369 = vld [vmem:[%s1089 + $0x22] sm:$0xff]
        %v2370 = vld [vmem:[%s1089 + $0x32] sm:$0xff]
        %v2371 = vld [vmem:[%s1089 + $0x42] sm:$0xff]
        %v2372 = vld [vmem:[%s1089 + $0x52] sm:$0xff]
        %v2373 = vld [vmem:[%s1089 + $0x62] sm:$0xff]
        %v2374 = vld [vmem:[%s1089 + $0x72] sm:$0xff]
        %v2375 = vpack.c.bf16 %v2368, %v2367
        %v2376 = vpack.c.bf16 %v2370, %v2369
        %v2377 = vpack.c.bf16 %v2372, %v2371
        %v2378 = vpack.c.bf16 %v2374, %v2373
        %s2379 = scalar_lea.vmem [#allocation8], 512
        %v2380 = vld [vmem:[%s2379] sm:$0xf]
        %v2381 = vld [vmem:[%s2379 + $0x4] sm:$0xf]
        %v2382 = vld [vmem:[%s2379 + $0x8] sm:$0xf]
        %v2383 = vld [vmem:[%s2379 + $0xc] sm:$0xf]
        %v2384 = vld [vmem:[%s2379 + $0x10] sm:$0xf]
        %v2385 = vld [vmem:[%s2379 + $0x14] sm:$0xf]
        %v2386 = vld [vmem:[%s2379 + $0x18] sm:$0xf]
        %v2387 = vld [vmem:[%s2379 + $0x1c] sm:$0xf]
        %v2388 = vld [vmem:[%s2379 + $0x20] sm:$0xf]
        %v2389 = vld [vmem:[%s2379 + $0x24] sm:$0xf]
        %v2390 = vld [vmem:[%s2379 + $0x28] sm:$0xf]
        %v2391 = vld [vmem:[%s2379 + $0x2c] sm:$0xf]
        %v2392 = vld [vmem:[%s2379 + $0x30] sm:$0xf]
        %v2393 = vld [vmem:[%s2379 + $0x34] sm:$0xf]
        %v2394 = vld [vmem:[%s2379 + $0x38] sm:$0xf]
        %v2395 = vld [vmem:[%s2379 + $0x3c] sm:$0xf]
        %v2412 = vunpack.c.l.b16 %v2380
        %v2413 = vunpack.c.l.b16 %v2381
        %v2414 = vunpack.c.l.b16 %v2382
        %v2415 = vunpack.c.l.b16 %v2383
        %v2416 = vunpack.c.l.b16 %v2384
        %v2417 = vunpack.c.l.b16 %v2385
        %v2418 = vunpack.c.l.b16 %v2386
        %v2419 = vunpack.c.l.b16 %v2387
        %v2420 = vunpack.c.l.b16 %v2388
        %v2421 = vunpack.c.l.b16 %v2389
        %v2422 = vunpack.c.l.b16 %v2390
        %v2423 = vunpack.c.l.b16 %v2391
        %v2424 = vunpack.c.l.b16 %v2392
        %v2425 = vunpack.c.l.b16 %v2393
        %v2426 = vunpack.c.l.b16 %v2394
        %v2427 = vunpack.c.l.b16 %v2395
        %v2428 = vpack.c.b16 %v2413, %v2412
        %v2429 = vpack.c.b16 %v2415, %v2414
        %v2430 = vpack.c.b16 %v2417, %v2416
        %v2431 = vpack.c.b16 %v2419, %v2418
        %v2432 = vpack.c.b16 %v2421, %v2420
        %v2433 = vpack.c.b16 %v2423, %v2422
        %v2434 = vpack.c.b16 %v2425, %v2424
        %v2435 = vpack.c.b16 %v2427, %v2426
        %2444 = vmatpush.bf16.msra.mxu0 %v2435
        %2445 = vmatpush.bf16.msra.mxu0 %v2434
        %2446 = vmatpush.bf16.msra.mxu0 %v2433
        %2447 = vmatpush.bf16.msra.mxu0 %v2432
        %2448 = vmatpush.bf16.msra.mxu0 %v2431
        %2449 = vmatpush.bf16.msra.mxu0 %v2430
        %2450 = vmatpush.bf16.msra.mxu0 %v2429
        %2451 = vmatpush.bf16.msra.mxu0 %v2428
        %2452 = vmatmul.bf16.gmra.mxu0 %v2375
        %v2453 = vpop.f32.mrf.mxu0
        %v2454 = vadd.f32 0.0, %v2453
        %v2455 = vpop.f32.mrf.mxu0
        %v2456 = vadd.f32 0.0, %v2455
        %2457 = vmatmul.bf16.gmra.mxu0 %v2376
        %v2458 = vpop.f32.mrf.mxu0
        %v2459 = vadd.f32 0.0, %v2458
        %v2460 = vpop.f32.mrf.mxu0
        %v2461 = vadd.f32 0.0, %v2460
        %2462 = vmatmul.bf16.gmra.mxu0 %v2377
        %v2463 = vpop.f32.mrf.mxu0
        %v2464 = vadd.f32 0.0, %v2463
        %v2465 = vpop.f32.mrf.mxu0
        %v2466 = vadd.f32 0.0, %v2465
        %2467 = vmatmul.bf16.gmra.mxu0 %v2378
        %v2468 = vpop.f32.mrf.mxu0
        %v2469 = vadd.f32 0.0, %v2468
        %v2470 = vpop.f32.mrf.mxu0
        %v2471 = vadd.f32 0.0, %v2470
        %2472 = vdwg.mxu0
        %v2473 = vadd.f32 %v2359, %v2454
        %v2474 = vadd.f32 %v2360, %v2456
        %v2475 = vadd.f32 %v2361, %v2459
        %v2476 = vadd.f32 %v2362, %v2461
        %v2477 = vadd.f32 %v2363, %v2464
        %v2478 = vadd.f32 %v2364, %v2466
        %v2479 = vadd.f32 %v2365, %v2469
        %v2480 = vadd.f32 %v2366, %v2471
        %v2481 = vld [vmem:[%s5] sm:$0x1]
        %v2483 = vperm.slane %v2481, 0
        %v2485 = vmul.f32 %v2473, %v2483
        %v2486 = vmul.f32 %v2474, %v2483
        %v2487 = vmul.f32 %v2475, %v2483
        %v2488 = vmul.f32 %v2476, %v2483
        %v2489 = vmul.f32 %v2477, %v2483
        %v2490 = vmul.f32 %v2478, %v2483
        %v2491 = vmul.f32 %v2479, %v2483
        %v2492 = vmul.f32 %v2480, %v2483
        %v2493 = vld [vmem:[%s6] sm:$0x1]
        %v2495 = vperm.slane %v2493, 0
        %v2497 = vadd.f32 %v2485, %v2495
        %v2498 = vadd.f32 %v2486, %v2495
        %v2499 = vadd.f32 %v2487, %v2495
        %v2500 = vadd.f32 %v2488, %v2495
        %v2501 = vadd.f32 %v2489, %v2495
        %v2502 = vadd.f32 %v2490, %v2495
        %v2503 = vadd.f32 %v2491, %v2495
        %v2504 = vadd.f32 %v2492, %v2495
        %v2505 = vmax.f32 %v2497, 0.0
        %v2506 = vmax.f32 %v2498, 0.0
        %v2507 = vmax.f32 %v2499, 0.0
        %v2508 = vmax.f32 %v2500, 0.0
        %v2509 = vmax.f32 %v2501, 0.0
        %v2510 = vmax.f32 %v2502, 0.0
        %v2511 = vmax.f32 %v2503, 0.0
        %v2512 = vmax.f32 %v2504, 0.0
        %2513 = vst [vmem:[%s331] sm:$0xff] %v2505
        %2514 = vst [vmem:[%s331 + $0x8] sm:$0xff] %v2506
        %2515 = vst [vmem:[%s331 + $0x10] sm:$0xff] %v2507
        %2516 = vst [vmem:[%s331 + $0x18] sm:$0xff] %v2508
        %2517 = vst [vmem:[%s331 + $0x20] sm:$0xff] %v2509
        %2518 = vst [vmem:[%s331 + $0x28] sm:$0xff] %v2510
        %2519 = vst [vmem:[%s331 + $0x30] sm:$0xff] %v2511
        %2520 = vst [vmem:[%s331 + $0x38] sm:$0xff] %v2512
        %s2521 = sand.u32 %s185, 1
        %s2522 = scalar_lea.sflag [#allocation5], %s2521
        %s2523 = sand.u32 %s185, 1
        %s2524 = smul.addr %s2523, 64
        %s2525 = scalar_lea.vmem [#allocation9], %s2524
        // Predicated region
        $region61: #{tpu_custom_call.1} parent=47 // pred_check
          %p2526 = pneg %p195
        $region62: #{tpu_custom_call.1} parent=47 // pred_check_branch
          %2528 = sbr.rel (%p2526) target = $region64
        $region63: #{tpu_custom_call.1} parent=47 // pred_region
          %2530 = vsyncadd %s2522, 0
          %s2531 = smul.addr %s25, 8
          %s2532 = smul.addr %s2531, 8
          %s2533 = scalar_lea.hbm %s7, %s2532
          %s2534 = sshll.u32 %s2525, 4
          %s2535 = int_to_ptr.vmem [resolvable:$true] %s2534
          %s2536 = sshll.u32 %s2533, 4
          %s2537 = int_to_ptr.hbm [resolvable:$true] %s2536
          %2542 = dma.vmem_to_hbm [thread:$0]  %s2535, 1024, %s2537, %s2522, 128, 128, 8
        $region64: #{tpu_custom_call.1} parent=47 // pred_fallthru
          _
      $region48: #{tpu_custom_call.1} parent=5 // pred_fallthru
        _
      %p2543 = scmp.le.s32.totalorder 2, %s20
      // Predicated region
      $region65: #{tpu_custom_call.1} parent=5 // pred_check
        %p2544 = pneg %p2543
      $region66: #{tpu_custom_call.1} parent=5 // pred_check_branch
        %2546 = sbr.rel (%p2544) target = $region68
      $region67: #{tpu_custom_call.1} parent=5 // pred_region
        %s2547 = ssub.s32 %s20, 2
        // Predicated region
        $region69: #{tpu_custom_call.1} parent=67 // pred_check
          %p2548 = pneg %p201
        $region70: #{tpu_custom_call.1} parent=67 // pred_check_branch
          %2550 = sbr.rel (%p2548) target = $region72
        $region71: #{tpu_custom_call.1} parent=67 // pred_region
          %s2551 = sand.u32 %s186, 1
          %s2552 = scalar_lea.sflag [#allocation5], %s2551
          %s2553 = sand.u32 %s186, 1
          %s2554 = smul.addr %s2553, 64
          %s2555 = scalar_lea.vmem [#allocation9], %s2554
          %2557 = dma.done %s2552, 1024
        $region72: #{tpu_custom_call.1} parent=67 // pred_fallthru
          _
      $region68: #{tpu_custom_call.1} parent=5 // pred_fallthru
        _
    $region6: #{tpu_custom_call.1} parent=1 // loop_footer
      %s24 = sadd.s32 1, %s20
    $region7: #{tpu_custom_call.1} parent=1 // loop_footer_branch
      %19 = sbr.rel target = $region3
    $region8: #{tpu_custom_call.1} parent=1 // loop_exit
      _
    %2558 = vsyncpa [#allocation4], 1
    %s2559 = scalar_lea.sflag [#allocation4], 1
    %2560 = vsyncpa %s2559, 1
    %2561 = vsyncpa [#allocation7], 1
    %2562 = vsyncpa [#allocation5], 1
    %s2563 = scalar_lea.sflag [#allocation5], 1
    %2564 = vsyncpa %s2563, 1

</llo_original>
